<compile_context>
chip_gen: v5e
topology: v5e:2x2
jax: 0.10.0
libtpu: 0.0.40
codegen_flags: <defaults>
</compile_context>

<pallas_src>
import functools
import math

import jax
import jax.numpy as jnp
import numpy as np
from jax.experimental import pallas as pl
from jax.experimental.pallas import tpu as pltpu


def _self_attn_kernel(x_full_ref, x_tile_ref, wq_ref, wk_ref, wv_ref, wout_ref,
                      bq_ref, bk_ref, bv_ref, bout_ref,
                      o_ref, k_scr, v_scr, *,
                      num_heads, head_dim, inv_sqrt_c, compute_dtype, approx_recip):
    qt = pl.program_id(1)
    C = x_tile_ref.shape[1]
    TQ = x_tile_ref.shape[2]

    # --- once per batch: K / V for all spatial positions, cached in VMEM scratch ---
    @pl.when(qt == 0)
    def _():
        xf = x_full_ref[0].astype(compute_dtype)                               # (C, S)
        kf = jnp.dot(wk_ref[...], xf, preferred_element_type=jnp.float32) + bk_ref[...]
        vf = jnp.dot(wv_ref[...], xf, preferred_element_type=jnp.float32) + bv_ref[...]
        k_scr[...] = kf.astype(compute_dtype)
        v_scr[...] = vf.astype(compute_dtype)

    # --- per query tile ---
    x_q = x_tile_ref[0]                                                        # (C, TQ) f32 (residual)
    q_all = (jnp.dot(wq_ref[...], x_q.astype(compute_dtype),
                     preferred_element_type=jnp.float32)
             + bq_ref[...]).astype(compute_dtype)                              # (C, TQ)

    out_acc = jnp.zeros((C, TQ), jnp.float32)
    for h in range(num_heads):
        lo = h * head_dim
        hi = lo + head_dim
        qh = q_all[lo:hi, :]                                                   # (D, TQ)
        kh = k_scr[lo:hi, :]                                                   # (D, S)
        vh = v_scr[lo:hi, :]                                                   # (D, S)

        # scores: contract head_dim of q and k directly (no k.T relayout).
        # NOTE: scale is 1/sqrt(C) (full channels), matching the PyTorch source.
        s = jax.lax.dot_general(qh, kh, (((0,), (0,)), ((), ())),
                                preferred_element_type=jnp.float32)            # (TQ, S)
        s = s * inv_sqrt_c

        # softmax over keys (lane axis); reciprocal goes to the EUP slot.
        m = jnp.max(s, axis=-1, keepdims=True)
        p = jnp.exp(s - m)
        denom = jnp.sum(p, axis=-1, keepdims=True)
        p = (p * pl.reciprocal(denom, approx=approx_recip)).astype(compute_dtype)

        # attention value: contract the key axis of v and p (no transposes).
        avh = jax.lax.dot_general(vh, p, (((1,), (1,)), ((), ())),
                                  preferred_element_type=jnp.float32)          # (D, TQ)

        # fused per-head output projection (avoids head-concat relayout).
        out_acc = out_acc + jnp.dot(wout_ref[:, lo:hi], avh.astype(compute_dtype),
                                    preferred_element_type=jnp.float32)        # (C, TQ)

    # bias + residual; output block is lane-dense in S.
    o_ref[...] = (out_acc + bout_ref[...] + x_q)[None, :, :]


def _pick_tile_q(s):
    for t in (512, 256, 128):
        if s % t == 0:
            return t
    return s


def _default_vmem_limit_bytes():
    # Raise the scoped-VMEM limit (defaults: 16 MiB v5e / 32 MiB v6e, v7x) while
    # staying safely under physical capacity (64 MiB on v7x).
    try:
        cap = int(pltpu.get_tpu_info().vmem_capacity_bytes)
    except Exception:
        cap = 64 * 1024 * 1024
    return min(int(cap * 0.8), 100 * 1024 * 1024)


def self_attention_pallas(x, gamma, beta, wqkv, wout, bout, *, num_heads=1,
                          eps=1e-5, compute_dtype=jnp.bfloat16, tile_q=None):
    """x: (B, C, H, W) f32 NCHW.  wqkv: (3C, C), wout: (C, C), bout: (C,)."""
    B, C, H, W = x.shape
    S = H * W
    assert C % num_heads == 0
    D = C // num_heads

    if tile_q is None:
        tile_q = _pick_tile_q(S)
    assert S % tile_q == 0, f"S={S} must be divisible by tile_q={tile_q}"
    nq = S // tile_q

    # BatchNorm2d training-mode batch statistics (biased variance over N,H,W).
    mean = jnp.mean(x, axis=(0, 2, 3))
    var = jnp.var(x, axis=(0, 2, 3))
    scale = gamma * jax.lax.rsqrt(var + eps)              # (C,)
    shift = beta - mean * scale                           # (C,)

    # Regroup interleaved per-head [q,k,v] rows of wqkv into wq / wk / wv (C, C):
    # head h of wq gets rows [3hD, 3hD+D) of wqkv, etc.
    w3 = wqkv.reshape(num_heads, 3, D, C)
    wq = w3[:, 0].reshape(C, C)
    wk = w3[:, 1].reshape(C, C)
    wv = w3[:, 2].reshape(C, C)

    # Fold the BN affine into the bias-free 1x1 conv.
    def fold(w):
        return (w * scale[None, :]).astype(compute_dtype), (w @ shift).reshape(C, 1)

    wq_e, bq = fold(wq)
    wk_e, bk = fold(wk)
    wv_e, bv = fold(wv)
    wout_c = wout.astype(compute_dtype)
    bout2 = bout.reshape(C, 1)

    # NCHW -> (B, C, S): pure reshape, spatial dim lands on the 128-lane axis.
    x3 = x.reshape(B, C, S)

    kernel = functools.partial(
        _self_attn_kernel,
        num_heads=num_heads, head_dim=D, inv_sqrt_c=1.0 / math.sqrt(C),
        compute_dtype=compute_dtype,
        approx_recip=(jnp.dtype(compute_dtype) == jnp.dtype(jnp.bfloat16)))

    # Advisory cost estimate so XLA schedules the BN-stat reductions around us.
    flops = int(B * (8 * S * C * C + 4 * S * S * C))
    transcendentals = int(B * num_heads * S * S)
    bytes_accessed = int(3 * B * S * C * 4 + 4 * C * C * jnp.dtype(compute_dtype).itemsize)

    out3 = pl.pallas_call(
        kernel,
        out_shape=jax.ShapeDtypeStruct((B, C, S), jnp.float32),
        grid_spec=pltpu.PrefetchScalarGridSpec(
            num_scalar_prefetch=0,
            grid=(B, nq),
            in_specs=[
                pl.BlockSpec((1, C, S), lambda b, q: (b, 0, 0)),        # x full (K/V source)
                pl.BlockSpec((1, C, tile_q), lambda b, q: (b, 0, q)),   # x query tile (Q + residual)
                pl.BlockSpec((C, C), lambda b, q: (0, 0)),              # wq (BN folded)
                pl.BlockSpec((C, C), lambda b, q: (0, 0)),              # wk (BN folded)
                pl.BlockSpec((C, C), lambda b, q: (0, 0)),              # wv (BN folded)
                pl.BlockSpec((C, C), lambda b, q: (0, 0)),              # wout
                pl.BlockSpec((C, 1), lambda b, q: (0, 0)),              # bq (from BN shift)
                pl.BlockSpec((C, 1), lambda b, q: (0, 0)),              # bk
                pl.BlockSpec((C, 1), lambda b, q: (0, 0)),              # bv
                pl.BlockSpec((C, 1), lambda b, q: (0, 0)),              # bout
            ],
            out_specs=pl.BlockSpec((1, C, tile_q), lambda b, q: (b, 0, q)),
            scratch_shapes=[pltpu.VMEM((C, S), compute_dtype),          # K cache
                            pltpu.VMEM((C, S), compute_dtype)],         # V cache
        ),
        compiler_params=pltpu.CompilerParams(
            dimension_semantics=("parallel", "arbitrary"),
            vmem_limit_bytes=_default_vmem_limit_bytes()),
        cost_estimate=pl.CostEstimate(flops=flops,
                                      transcendentals=transcendentals,
                                      bytes_accessed=bytes_accessed),
    )(x3, x3, wq_e, wk_e, wv_e, wout_c, bq, bk, bv, bout2)

    return out3.reshape(B, C, H, W)


def self_attention_reference(x, gamma, beta, wqkv, wout, bout, *, num_heads=1, eps=1e-5):
    """Pure-JAX mirror of the PyTorch forward (training-mode BatchNorm)."""
    B, C, H, W = x.shape
    D = C // num_heads
    mean = x.mean(axis=(0, 2, 3), keepdims=True)
    var = x.var(axis=(0, 2, 3), keepdims=True)
    xn = (x - mean) / jnp.sqrt(var + eps) * gamma.reshape(1, C, 1, 1) \
        + beta.reshape(1, C, 1, 1)
    qkv = jnp.einsum('oc,bchw->bohw', wqkv, xn)
    qkv = qkv.reshape(B, num_heads, 3 * D, H, W)
    q, k, v = qkv[:, :, :D], qkv[:, :, D:2 * D], qkv[:, :, 2 * D:]
    attn = jnp.einsum('bnchw,bncyx->bnhwyx', q, k) / math.sqrt(C)
    attn = attn.reshape(B, num_heads, H, W, H * W)
    attn = jax.nn.softmax(attn, axis=-1)
    attn = attn.reshape(B, num_heads, H, W, H, W)
    av = jnp.einsum('bnhwyx,bncyx->bnchw', attn, v).reshape(B, C, H, W)
    out = jnp.einsum('oc,bchw->bohw', wout, av) + bout.reshape(1, C, 1, 1)
    return x + out


if __name__ == "__main__":
    def make_inputs(key, B, C, H, W):
        kx, kg, kb, kq, kw, kbo = jax.random.split(key, 6)
        x = jax.random.normal(kx, (B, C, H, W), dtype=jnp.float32)
        gamma = 1.0 + 0.1 * jax.random.normal(kg, (C,), dtype=jnp.float32)
        beta = 0.1 * jax.random.normal(kb, (C,), dtype=jnp.float32)
        wqkv = jax.random.normal(kq, (3 * C, C), dtype=jnp.float32) / math.sqrt(C)
        wout = jax.random.normal(kw, (C, C), dtype=jnp.float32) / math.sqrt(C)
        bout = 0.1 * jax.random.normal(kbo, (C,), dtype=jnp.float32)
        return x, gamma, beta, wqkv, wout, bout

    key = jax.random.PRNGKey(0)
    k1, k2 = jax.random.split(key)

    # Case 1: single head; query tiling exercised (S=256, tile_q=128 -> 2 tiles).
    args1 = make_inputs(k1, 2, 4, 16, 16)
    ref1 = jax.block_until_ready(self_attention_reference(*args1, num_heads=1))

    out_f32 = jax.block_until_ready(
        self_attention_pallas(*args1, num_heads=1,
                              compute_dtype=jnp.float32, tile_q=128))
    np.testing.assert_allclose(np.asarray(out_f32), np.asarray(ref1),
                               rtol=2e-4, atol=2e-4)

    out_bf16 = jax.block_until_ready(
        self_attention_pallas(*args1, num_heads=1,
                              compute_dtype=jnp.bfloat16, tile_q=128))
    np.testing.assert_allclose(np.asarray(out_bf16), np.asarray(ref1),
                               rtol=1.5e-1, atol=1.5e-1)   # bf16 matmul tolerance

    # Case 2: two heads; default tile picker (single 256-wide query tile), f32 check.
    args2 = make_inputs(k2, 2, 8, 16, 16)
    ref2 = jax.block_until_ready(self_attention_reference(*args2, num_heads=2))
    out2 = jax.block_until_ready(
        self_attention_pallas(*args2, num_heads=2, compute_dtype=jnp.float32))
    np.testing.assert_allclose(np.asarray(out2), np.asarray(ref2),
                               rtol=2e-4, atol=2e-4)

    print("KERNEL_OK")
</pallas_src>

<mosaic_0001>
module attributes {stable_mosaic.version = 11 : i64} {
  func.func @_self_attn_kernel(%arg0: i32, %arg1: i32, %arg2: memref<1x4x256xf32, #tpu.memory_space<vmem>>, %arg3: memref<1x4x128xf32, #tpu.memory_space<vmem>>, %arg4: memref<4x4xf32, #tpu.memory_space<vmem>>, %arg5: memref<4x4xf32, #tpu.memory_space<vmem>>, %arg6: memref<4x4xf32, #tpu.memory_space<vmem>>, %arg7: memref<4x4xf32, #tpu.memory_space<vmem>>, %arg8: memref<4x1xf32, #tpu.memory_space<vmem>>, %arg9: memref<4x1xf32, #tpu.memory_space<vmem>>, %arg10: memref<4x1xf32, #tpu.memory_space<vmem>>, %arg11: memref<4x1xf32, #tpu.memory_space<vmem>>, %arg12: memref<1x4x128xf32, #tpu.memory_space<vmem>>, %arg13: memref<4x256xf32, #tpu.memory_space<vmem>>, %arg14: memref<4x256xf32, #tpu.memory_space<vmem>>) attributes {dimension_semantics = [#tpu.dimension_semantics<parallel>, #tpu.dimension_semantics<arbitrary>], iteration_bounds = array<i64: 2, 2>, scalar_prefetch = 0 : i64, scratch_operands = 2 : i64, tpu.core_type = #tpu.core_type<tc>, window_params = [{transform_indices = @transform_0, window_bounds = array<i64: 1, 4, 256>}, {transform_indices = @transform_1, window_bounds = array<i64: 1, 4, 128>}, {pipeline_mode = #tpu.pipeline_mode<synchronous>, transform_indices = @transform_2, window_bounds = array<i64: 4, 4>}, {pipeline_mode = #tpu.pipeline_mode<synchronous>, transform_indices = @transform_3, window_bounds = array<i64: 4, 4>}, {pipeline_mode = #tpu.pipeline_mode<synchronous>, transform_indices = @transform_4, window_bounds = array<i64: 4, 4>}, {pipeline_mode = #tpu.pipeline_mode<synchronous>, transform_indices = @transform_5, window_bounds = array<i64: 4, 4>}, {pipeline_mode = #tpu.pipeline_mode<synchronous>, transform_indices = @transform_6, window_bounds = array<i64: 4, 1>}, {pipeline_mode = #tpu.pipeline_mode<synchronous>, transform_indices = @transform_7, window_bounds = array<i64: 4, 1>}, {pipeline_mode = #tpu.pipeline_mode<synchronous>, transform_indices = @transform_8, window_bounds = array<i64: 4, 1>}, {pipeline_mode = #tpu.pipeline_mode<synchronous>, transform_indices = @transform_9, window_bounds = array<i64: 4, 1>}, {transform_indices = @transform_10, window_bounds = array<i64: 1, 4, 128>}]} {
    %c0_i32 = arith.constant 0 : i32
    %0 = arith.cmpi eq, %arg1, %c0_i32 : i32
    %1 = arith.extui %0 : i1 to i32
    %c0_i32_0 = arith.constant 0 : i32
    %2 = arith.cmpi ne, %1, %c0_i32_0 : i32
    scf.if %2 {
      %c0_25 = arith.constant 0 : index
      %c0_26 = arith.constant 0 : index
      %c0_27 = arith.constant 0 : index
      %36 = vector.load %arg2[%c0_25, %c0_26, %c0_27] : memref<1x4x256xf32, #tpu.memory_space<vmem>>, vector<1x4x256xf32>
      %37 = vector.shape_cast %36 : vector<1x4x256xf32> to vector<4x256xf32>
      %c0_28 = arith.constant 0 : index
      %c0_29 = arith.constant 0 : index
      %38 = vector.load %arg5[%c0_28, %c0_29] : memref<4x4xf32, #tpu.memory_space<vmem>>, vector<4x4xf32>
      %cst_30 = arith.constant dense<0.000000e+00> : vector<4x256xf32>
      %39 = tpu.matmul %38, %37, %cst_30 {dimension_numbers = #tpu.dot_dimension_numbers<[1], [0], [0], [1], [0, 0, 1, 1], [], []>} : vector<4x4xf32>, vector<4x256xf32>, vector<4x256xf32> -> vector<4x256xf32>
      %c0_31 = arith.constant 0 : index
      %c0_32 = arith.constant 0 : index
      %40 = vector.load %arg9[%c0_31, %c0_32] : memref<4x1xf32, #tpu.memory_space<vmem>>, vector<4x1xf32>
      %41 = vector.broadcast %40 : vector<4x1xf32> to vector<4x256xf32>
      %42 = arith.addf %39, %41 : vector<4x256xf32>
      %c0_33 = arith.constant 0 : index
      %c0_34 = arith.constant 0 : index
      %43 = vector.load %arg6[%c0_33, %c0_34] : memref<4x4xf32, #tpu.memory_space<vmem>>, vector<4x4xf32>
      %cst_35 = arith.constant dense<0.000000e+00> : vector<4x256xf32>
      %44 = tpu.matmul %43, %37, %cst_35 {dimension_numbers = #tpu.dot_dimension_numbers<[1], [0], [0], [1], [0, 0, 1, 1], [], []>} : vector<4x4xf32>, vector<4x256xf32>, vector<4x256xf32> -> vector<4x256xf32>
      %c0_36 = arith.constant 0 : index
      %c0_37 = arith.constant 0 : index
      %45 = vector.load %arg10[%c0_36, %c0_37] : memref<4x1xf32, #tpu.memory_space<vmem>>, vector<4x1xf32>
      %46 = vector.broadcast %45 : vector<4x1xf32> to vector<4x256xf32>
      %47 = arith.addf %44, %46 : vector<4x256xf32>
      %c0_38 = arith.constant 0 : index
      %c0_39 = arith.constant 0 : index
      %48 = vector.load %arg13[%c0_38, %c0_39] : memref<4x256xf32, #tpu.memory_space<vmem>>, vector<4x256xf32>
      tpu.vector_store %arg13[%c0_38, %c0_39], %42 {strides = array<i32>} : memref<4x256xf32, #tpu.memory_space<vmem>>, vector<4x256xf32>,
      %c0_40 = arith.constant 0 : index
      %c0_41 = arith.constant 0 : index
      %49 = vector.load %arg14[%c0_40, %c0_41] : memref<4x256xf32, #tpu.memory_space<vmem>>, vector<4x256xf32>
      tpu.vector_store %arg14[%c0_40, %c0_41], %47 {strides = array<i32>} : memref<4x256xf32, #tpu.memory_space<vmem>>, vector<4x256xf32>,
    } else {
    }
    %c0 = arith.constant 0 : index
    %c0_1 = arith.constant 0 : index
    %c0_2 = arith.constant 0 : index
    %3 = vector.load %arg3[%c0, %c0_1, %c0_2] : memref<1x4x128xf32, #tpu.memory_space<vmem>>, vector<1x4x128xf32>
    %4 = vector.shape_cast %3 : vector<1x4x128xf32> to vector<4x128xf32>
    %c0_3 = arith.constant 0 : index
    %c0_4 = arith.constant 0 : index
    %5 = vector.load %arg4[%c0_3, %c0_4] : memref<4x4xf32, #tpu.memory_space<vmem>>, vector<4x4xf32>
    %cst = arith.constant dense<0.000000e+00> : vector<4x128xf32>
    %6 = tpu.matmul %5, %4, %cst {dimension_numbers = #tpu.dot_dimension_numbers<[1], [0], [0], [1], [0, 0, 1, 1], [], []>} : vector<4x4xf32>, vector<4x128xf32>, vector<4x128xf32> -> vector<4x128xf32>
    %c0_5 = arith.constant 0 : index
    %c0_6 = arith.constant 0 : index
    %7 = vector.load %arg8[%c0_5, %c0_6] : memref<4x1xf32, #tpu.memory_space<vmem>>, vector<4x1xf32>
    %8 = vector.broadcast %7 : vector<4x1xf32> to vector<4x128xf32>
    %9 = arith.addf %6, %8 : vector<4x128xf32>
    %cst_7 = arith.constant 0.000000e+00 : f32
    %10 = vector.broadcast %cst_7 : f32 to vector<4x128xf32>
    %c0_8 = arith.constant 0 : index
    %c0_9 = arith.constant 0 : index
    %11 = vector.load %arg13[%c0_8, %c0_9] : memref<4x256xf32, #tpu.memory_space<vmem>>, vector<4x256xf32>
    %c0_10 = arith.constant 0 : index
    %c0_11 = arith.constant 0 : index
    %12 = vector.load %arg14[%c0_10, %c0_11] : memref<4x256xf32, #tpu.memory_space<vmem>>, vector<4x256xf32>
    %cst_12 = arith.constant dense<0.000000e+00> : vector<128x256xf32>
    %13 = tpu.matmul %9, %11, %cst_12 {dimension_numbers = #tpu.dot_dimension_numbers<[0], [0], [1], [1], [0, 1, 1, 1], [], []>} : vector<4x128xf32>, vector<4x256xf32>, vector<128x256xf32> -> vector<128x256xf32>
    %cst_13 = arith.constant 5.000000e-01 : f32
    %14 = vector.broadcast %cst_13 : f32 to vector<128x256xf32>
    %15 = arith.mulf %13, %14 : vector<128x256xf32>
    %cst_14 = arith.constant dense<0xFF800000> : vector<128xf32>
    %16 = vector.multi_reduction <maximumf>, %15, %cst_14 [1] : vector<128x256xf32> to vector<128xf32>
    %17 = vector.shape_cast %16 : vector<128xf32> to vector<128x1xf32>
    %18 = vector.broadcast %17 : vector<128x1xf32> to vector<128x256xf32>
    %19 = arith.subf %15, %18 : vector<128x256xf32>
    %20 = math.exp %19 : vector<128x256xf32>
    %cst_15 = arith.constant dense<0.000000e+00> : vector<128xf32>
    %21 = vector.multi_reduction <add>, %20, %cst_15 [1] : vector<128x256xf32> to vector<128xf32>
    %22 = vector.shape_cast %21 : vector<128xf32> to vector<128x1xf32>
    %23 = tpu.reciprocal %22 : vector<128x1xf32> -> vector<128x1xf32>
    %24 = vector.broadcast %23 : vector<128x1xf32> to vector<128x256xf32>
    %25 = arith.mulf %20, %24 : vector<128x256xf32>
    %cst_16 = arith.constant dense<0.000000e+00> : vector<4x128xf32>
    %26 = tpu.matmul %12, %25, %cst_16 {dimension_numbers = #tpu.dot_dimension_numbers<[1], [1], [0], [0], [0, 0, 1, 0], [], []>} : vector<4x256xf32>, vector<128x256xf32>, vector<4x128xf32> -> vector<4x128xf32>
    %c0_17 = arith.constant 0 : index
    %c0_18 = arith.constant 0 : index
    %27 = vector.load %arg7[%c0_17, %c0_18] : memref<4x4xf32, #tpu.memory_space<vmem>>, vector<4x4xf32>
    %cst_19 = arith.constant dense<0.000000e+00> : vector<4x128xf32>
    %28 = tpu.matmul %27, %26, %cst_19 {dimension_numbers = #tpu.dot_dimension_numbers<[1], [0], [0], [1], [0, 0, 1, 1], [], []>} : vector<4x4xf32>, vector<4x128xf32>, vector<4x128xf32> -> vector<4x128xf32>
    %29 = arith.addf %10, %28 : vector<4x128xf32>
    %c0_20 = arith.constant 0 : index
    %c0_21 = arith.constant 0 : index
    %30 = vector.load %arg11[%c0_20, %c0_21] : memref<4x1xf32, #tpu.memory_space<vmem>>, vector<4x1xf32>
    %31 = vector.broadcast %30 : vector<4x1xf32> to vector<4x128xf32>
    %32 = arith.addf %29, %31 : vector<4x128xf32>
    %33 = arith.addf %32, %4 : vector<4x128xf32>
    %34 = vector.shape_cast %33 : vector<4x128xf32> to vector<1x4x128xf32>
    %c0_22 = arith.constant 0 : index
    %c0_23 = arith.constant 0 : index
    %c0_24 = arith.constant 0 : index
    %35 = vector.load %arg12[%c0_22, %c0_23, %c0_24] : memref<1x4x128xf32, #tpu.memory_space<vmem>>, vector<1x4x128xf32>
    tpu.vector_store %arg12[%c0_22, %c0_23, %c0_24], %34 {strides = array<i32>} : memref<1x4x128xf32, #tpu.memory_space<vmem>>, vector<1x4x128xf32>,
    return
  }
  func.func @transform_0(%arg0: i32, %arg1: i32) -> (i32, i32, i32) {
    %c0_i32 = arith.constant 0 : i32
    %c0_i32_0 = arith.constant 0 : i32
    %c0_i32_1 = arith.constant 0 : i32
    return %arg0, %c0_i32, %c0_i32_0 : i32, i32, i32
  }
  func.func @transform_1(%arg0: i32, %arg1: i32) -> (i32, i32, i32) {
    %c0_i32 = arith.constant 0 : i32
    %c0_i32_0 = arith.constant 0 : i32
    return %arg0, %c0_i32, %arg1 : i32, i32, i32
  }
  func.func @transform_2(%arg0: i32, %arg1: i32) -> (i32, i32) {
    %c0_i32 = arith.constant 0 : i32
    %c0_i32_0 = arith.constant 0 : i32
    %c0_i32_1 = arith.constant 0 : i32
    return %c0_i32, %c0_i32_0 : i32, i32
  }
  func.func @transform_3(%arg0: i32, %arg1: i32) -> (i32, i32) {
    %c0_i32 = arith.constant 0 : i32
    %c0_i32_0 = arith.constant 0 : i32
    %c0_i32_1 = arith.constant 0 : i32
    return %c0_i32, %c0_i32_0 : i32, i32
  }
  func.func @transform_4(%arg0: i32, %arg1: i32) -> (i32, i32) {
    %c0_i32 = arith.constant 0 : i32
    %c0_i32_0 = arith.constant 0 : i32
    %c0_i32_1 = arith.constant 0 : i32
    return %c0_i32, %c0_i32_0 : i32, i32
  }
  func.func @transform_5(%arg0: i32, %arg1: i32) -> (i32, i32) {
    %c0_i32 = arith.constant 0 : i32
    %c0_i32_0 = arith.constant 0 : i32
    %c0_i32_1 = arith.constant 0 : i32
    return %c0_i32, %c0_i32_0 : i32, i32
  }
  func.func @transform_6(%arg0: i32, %arg1: i32) -> (i32, i32) {
    %c0_i32 = arith.constant 0 : i32
    %c0_i32_0 = arith.constant 0 : i32
    %c0_i32_1 = arith.constant 0 : i32
    return %c0_i32, %c0_i32_0 : i32, i32
  }
  func.func @transform_7(%arg0: i32, %arg1: i32) -> (i32, i32) {
    %c0_i32 = arith.constant 0 : i32
    %c0_i32_0 = arith.constant 0 : i32
    %c0_i32_1 = arith.constant 0 : i32
    return %c0_i32, %c0_i32_0 : i32, i32
  }
  func.func @transform_8(%arg0: i32, %arg1: i32) -> (i32, i32) {
    %c0_i32 = arith.constant 0 : i32
    %c0_i32_0 = arith.constant 0 : i32
    %c0_i32_1 = arith.constant 0 : i32
    return %c0_i32, %c0_i32_0 : i32, i32
  }
  func.func @transform_9(%arg0: i32, %arg1: i32) -> (i32, i32) {
    %c0_i32 = arith.constant 0 : i32
    %c0_i32_0 = arith.constant 0 : i32
    %c0_i32_1 = arith.constant 0 : i32
    return %c0_i32, %c0_i32_0 : i32, i32
  }
  func.func @transform_10(%arg0: i32, %arg1: i32) -> (i32, i32, i32) {
    %c0_i32 = arith.constant 0 : i32
    %c0_i32_0 = arith.constant 0 : i32
    return %arg0, %c0_i32, %arg1 : i32, i32, i32
  }
}

</mosaic_0001>

<llo_original>
// kernel: tpu_custom_call.1
$region0: #{tpu_custom_call.1}
  #allocation0 [shape = 'u32[]', space=smem, size = 0x4, offset = 0x4, fixed_abs, tag = 'smem constant byte address 0x4 - core index']
  #allocation1 [shape = 'u32[72,128]{1,0:T(1,128)}', space=vmem, size = 0x9000, scoped, tag = 'internal scratch']
  #allocation2 [shape = 'f32[4,256]{1,0:T(4,128)}', space=vmem, size = 0x1000, scoped, tag = 'scratch operand']
  #allocation3 [shape = 'f32[4,256]{1,0:T(4,128)}', space=vmem, size = 0x1000, scoped, tag = 'scratch operand']
  %s0 = inlined_call_operand.hbm [shape: f32[2,4,256], index: 0, kind: input, shape index: {}]
  %s1 = inlined_call_operand.hbm [shape: f32[2,4,256], index: 1, kind: input, shape index: {}]
  %s2 = inlined_call_operand.vmem [shape: f32[4,4], index: 2, kind: input, shape index: {}]
  %s3 = inlined_call_operand.vmem [shape: f32[4,4], index: 3, kind: input, shape index: {}]
  %s4 = inlined_call_operand.vmem [shape: f32[4,4], index: 4, kind: input, shape index: {}]
  %s5 = inlined_call_operand.vmem [shape: f32[4,4], index: 5, kind: input, shape index: {}]
  %s6 = inlined_call_operand.vmem [shape: f32[4,1], index: 6, kind: input, shape index: {}]
  %s7 = inlined_call_operand.vmem [shape: f32[4,1], index: 7, kind: input, shape index: {}]
  %s8 = inlined_call_operand.vmem [shape: f32[4,1], index: 8, kind: input, shape index: {}]
  %s9 = inlined_call_operand.vmem [shape: f32[4,1], index: 9, kind: input, shape index: {}]
  %s10 = inlined_call_operand.hbm [shape: f32[2,4,256], index: 10, kind: output, shape index: {}]
  %s11 = sld [smem:[#allocation0]]
  $region85: #{tpu_custom_call.1} parent=0
    _
  %s13 = ssub.s32 1, %s11
  %s14 = scalar_select 0, %s13, %s11
  $region1: #{tpu_custom_call.1} parent=0
    #allocation4 [shape = 'u8[8192]{0}', space=vmem, size = 0x2000, scoped, tag = 'input window, operand 0']
    #allocation5 [shape = 's32[2]{0}', space=sflag, size = 0x8, scoped, tag = 'scoped memory for tpu_custom_call.1']
    #allocation6 [shape = 's32[2]{0}', space=sflag, size = 0x8, scoped, tag = 'scoped memory for tpu_custom_call.1']
    #allocation7 [shape = 'u8[4096]{0}', space=vmem, size = 0x1000, scoped, tag = 'input window, operand 1']
    #allocation8 [shape = 's32[2]{0}', space=sflag, size = 0x8, scoped, tag = 'scoped memory for tpu_custom_call.1']
    #allocation9 [shape = 'u8[4096]{0}', space=vmem, size = 0x1000, scoped, tag = 'output window, operand 0']
    %15 = vsyncpa [#allocation5], 0
    %s16 = scalar_lea.sflag [#allocation5], 1
    %17 = vsyncpa %s16, 0
    %18 = vsyncpa [#allocation8], 0
    %s19 = scalar_lea.sflag [#allocation8], 1
    %20 = vsyncpa %s19, 0
    %21 = vsyncpa [#allocation6], 0
    %s22 = scalar_lea.sflag [#allocation6], 1
    %23 = vsyncpa %s22, 0
    loop: start=0, step=1, limit=6
    $region2: #{tpu_custom_call.1} parent=1 // loop_pre_header
      _
    $region3: #{tpu_custom_call.1} parent=1 // loop_header
      %s25 = sphi 0, %s29
      %p26 = scmp.ge.s32.totalorder %s25, 6
      %s32 = sphi 0, %s44
      %s33 = sphi 0, %s40
      %s34 = sphi 0, %s32
      %s35 = sphi 0, %s33
      %s36 = sphi 0, %s34
      %s37 = sphi 0, %s35
      %s47 = sphi 0, %s49
      %s50 = sphi 0, %s47
      %s51 = sphi 0, %s50
      %s67 = sphi 0, %s51
      %s75 = sphi 0, %s77
      %s78 = sphi 0, %s75
      %s79 = sphi 0, %s78
      %s95 = sphi 0, %s79
      %s99 = sphi 0, %s99
      %s101 = sphi 0, %s99
      %s102 = sphi 0, %s101
      %s116 = sphi 0, %s102
      %s120 = sphi 0, %s120
      %s122 = sphi 0, %s120
      %s123 = sphi 0, %s122
      %s137 = sphi 0, %s123
      %s141 = sphi 0, %s141
      %s143 = sphi 0, %s141
      %s144 = sphi 0, %s143
      %s158 = sphi 0, %s144
      %s162 = sphi 0, %s162
      %s164 = sphi 0, %s162
      %s165 = sphi 0, %s164
      %s179 = sphi 0, %s165
      %s183 = sphi 0, %s183
      %s185 = sphi 0, %s183
      %s186 = sphi 0, %s185
      %s200 = sphi 0, %s186
      %s204 = sphi 0, %s204
      %s206 = sphi 0, %s204
      %s207 = sphi 0, %s206
      %s221 = sphi 0, %s207
      %s225 = sphi 0, %s225
      %s227 = sphi 0, %s225
      %s228 = sphi 0, %s227
      %s242 = sphi 0, %s228
      %s246 = sphi 0, %s246
      %s248 = sphi 0, %s246
      %s249 = sphi 0, %s248
      %s263 = sphi 0, %s249
      %s271 = sphi 0, %s273
      %s274 = sphi 0, %s271
      %s275 = sphi 0, %s274
      %s291 = sphi 0, %s275
    $region4: #{tpu_custom_call.1} parent=1 // loop_header_branch
      %28 = sbr.rel (%p26) target = $region8
    $region5: #{tpu_custom_call.1} parent=1 // loop_body
      %s30 = ssub.s32 %s25, 1
      %s31 = ssub.s32 %s25, 2
      %s38 = sadd.s32 1, %s33
      %p39 = scmp.ge.s32.totalorder %s38, 2
      %s40 = scalar_select %p39, 0, %s38
      %s41 = sadd.s32 1, %s32
      %s42 = scalar_select %p39, %s41, %s32
      %p43 = scmp.ge.s32.totalorder %s42, 2
      %s44 = scalar_select %p43, 0, %s42
      %s45 = ssub.s32 %s32, %s44
      %p46 = scmp.eq.s32.totalorder %s45, 0
      %s48 = sadd.s32 %s47, 1
      %s49 = scalar_select %p46, %s47, %s48
      %p52 = pneg %p46
      %p53 = scmp.eq.s32.totalorder %s25, 3
      %p54 = por %p52, %p53
      %p55 = scmp.ne.s32.totalorder %s47, %s50
      %p56 = scmp.eq.s32.totalorder %s25, 0
      %p57 = por %p55, %p56
      %p58 = scmp.ne.s32.totalorder %s47, %s50
      %p59 = scmp.eq.s32.totalorder %s30, 3
      %p60 = por %p58, %p59
      %p61 = scmp.ne.s32.totalorder %s50, %s51
      %p62 = scmp.eq.s32.totalorder %s30, 0
      %p63 = por %p61, %p62
      %p64 = scmp.ne.s32.totalorder %s50, %s51
      %p65 = scmp.eq.s32.totalorder %s31, 3
      %p66 = por %p64, %p65
      %p68 = scmp.ne.s32.totalorder %s51, %s67
      %p69 = scmp.eq.s32.totalorder %s31, 0
      %p70 = por %p68, %p69
      %s71 = ssub.s32 %s32, %s44
      %s72 = ssub.s32 %s33, %s40
      %s73 = sor.u32 %s71, %s72
      %p74 = scmp.eq.s32.totalorder %s73, 0
      %s76 = sadd.s32 %s75, 1
      %s77 = scalar_select %p74, %s75, %s76
      %p80 = pneg %p74
      %p81 = scmp.eq.s32.totalorder %s25, 3
      %p82 = por %p80, %p81
      %p83 = scmp.ne.s32.totalorder %s75, %s78
      %p84 = scmp.eq.s32.totalorder %s25, 0
      %p85 = por %p83, %p84
      %p86 = scmp.ne.s32.totalorder %s75, %s78
      %p87 = scmp.eq.s32.totalorder %s30, 3
      %p88 = por %p86, %p87
      %p89 = scmp.ne.s32.totalorder %s78, %s79
      %p90 = scmp.eq.s32.totalorder %s30, 0
      %p91 = por %p89, %p90
      %p92 = scmp.ne.s32.totalorder %s78, %s79
      %p93 = scmp.eq.s32.totalorder %s31, 3
      %p94 = por %p92, %p93
      %p96 = scmp.ne.s32.totalorder %s79, %s95
      %p97 = scmp.eq.s32.totalorder %s31, 0
      %p98 = por %p96, %p97
      %s100 = sadd.s32 %s99, 1
      %p103 = scmp.eq.s32.totalorder %s25, 3
      %p104 = scmp.ne.s32.totalorder %s99, %s101
      %p105 = scmp.eq.s32.totalorder %s25, 0
      %p106 = por %p104, %p105
      %p107 = scmp.ne.s32.totalorder %s99, %s101
      %p108 = scmp.eq.s32.totalorder %s30, 3
      %p109 = por %p107, %p108
      %p110 = scmp.ne.s32.totalorder %s101, %s102
      %p111 = scmp.eq.s32.totalorder %s30, 0
      %p112 = por %p110, %p111
      %p113 = scmp.ne.s32.totalorder %s101, %s102
      %p114 = scmp.eq.s32.totalorder %s31, 3
      %p115 = por %p113, %p114
      %p117 = scmp.ne.s32.totalorder %s102, %s116
      %p118 = scmp.eq.s32.totalorder %s31, 0
      %p119 = por %p117, %p118
      %s121 = sadd.s32 %s120, 1
      %p124 = scmp.eq.s32.totalorder %s25, 3
      %p125 = scmp.ne.s32.totalorder %s120, %s122
      %p126 = scmp.eq.s32.totalorder %s25, 0
      %p127 = por %p125, %p126
      %p128 = scmp.ne.s32.totalorder %s120, %s122
      %p129 = scmp.eq.s32.totalorder %s30, 3
      %p130 = por %p128, %p129
      %p131 = scmp.ne.s32.totalorder %s122, %s123
      %p132 = scmp.eq.s32.totalorder %s30, 0
      %p133 = por %p131, %p132
      %p134 = scmp.ne.s32.totalorder %s122, %s123
      %p135 = scmp.eq.s32.totalorder %s31, 3
      %p136 = por %p134, %p135
      %p138 = scmp.ne.s32.totalorder %s123, %s137
      %p139 = scmp.eq.s32.totalorder %s31, 0
      %p140 = por %p138, %p139
      %s142 = sadd.s32 %s141, 1
      %p145 = scmp.eq.s32.totalorder %s25, 3
      %p146 = scmp.ne.s32.totalorder %s141, %s143
      %p147 = scmp.eq.s32.totalorder %s25, 0
      %p148 = por %p146, %p147
      %p149 = scmp.ne.s32.totalorder %s141, %s143
      %p150 = scmp.eq.s32.totalorder %s30, 3
      %p151 = por %p149, %p150
      %p152 = scmp.ne.s32.totalorder %s143, %s144
      %p153 = scmp.eq.s32.totalorder %s30, 0
      %p154 = por %p152, %p153
      %p155 = scmp.ne.s32.totalorder %s143, %s144
      %p156 = scmp.eq.s32.totalorder %s31, 3
      %p157 = por %p155, %p156
      %p159 = scmp.ne.s32.totalorder %s144, %s158
      %p160 = scmp.eq.s32.totalorder %s31, 0
      %p161 = por %p159, %p160
      %s163 = sadd.s32 %s162, 1
      %p166 = scmp.eq.s32.totalorder %s25, 3
      %p167 = scmp.ne.s32.totalorder %s162, %s164
      %p168 = scmp.eq.s32.totalorder %s25, 0
      %p169 = por %p167, %p168
      %p170 = scmp.ne.s32.totalorder %s162, %s164
      %p171 = scmp.eq.s32.totalorder %s30, 3
      %p172 = por %p170, %p171
      %p173 = scmp.ne.s32.totalorder %s164, %s165
      %p174 = scmp.eq.s32.totalorder %s30, 0
      %p175 = por %p173, %p174
      %p176 = scmp.ne.s32.totalorder %s164, %s165
      %p177 = scmp.eq.s32.totalorder %s31, 3
      %p178 = por %p176, %p177
      %p180 = scmp.ne.s32.totalorder %s165, %s179
      %p181 = scmp.eq.s32.totalorder %s31, 0
      %p182 = por %p180, %p181
      %s184 = sadd.s32 %s183, 1
      %p187 = scmp.eq.s32.totalorder %s25, 3
      %p188 = scmp.ne.s32.totalorder %s183, %s185
      %p189 = scmp.eq.s32.totalorder %s25, 0
      %p190 = por %p188, %p189
      %p191 = scmp.ne.s32.totalorder %s183, %s185
      %p192 = scmp.eq.s32.totalorder %s30, 3
      %p193 = por %p191, %p192
      %p194 = scmp.ne.s32.totalorder %s185, %s186
      %p195 = scmp.eq.s32.totalorder %s30, 0
      %p196 = por %p194, %p195
      %p197 = scmp.ne.s32.totalorder %s185, %s186
      %p198 = scmp.eq.s32.totalorder %s31, 3
      %p199 = por %p197, %p198
      %p201 = scmp.ne.s32.totalorder %s186, %s200
      %p202 = scmp.eq.s32.totalorder %s31, 0
      %p203 = por %p201, %p202
      %s205 = sadd.s32 %s204, 1
      %p208 = scmp.eq.s32.totalorder %s25, 3
      %p209 = scmp.ne.s32.totalorder %s204, %s206
      %p210 = scmp.eq.s32.totalorder %s25, 0
      %p211 = por %p209, %p210
      %p212 = scmp.ne.s32.totalorder %s204, %s206
      %p213 = scmp.eq.s32.totalorder %s30, 3
      %p214 = por %p212, %p213
      %p215 = scmp.ne.s32.totalorder %s206, %s207
      %p216 = scmp.eq.s32.totalorder %s30, 0
      %p217 = por %p215, %p216
      %p218 = scmp.ne.s32.totalorder %s206, %s207
      %p219 = scmp.eq.s32.totalorder %s31, 3
      %p220 = por %p218, %p219
      %p222 = scmp.ne.s32.totalorder %s207, %s221
      %p223 = scmp.eq.s32.totalorder %s31, 0
      %p224 = por %p222, %p223
      %s226 = sadd.s32 %s225, 1
      %p229 = scmp.eq.s32.totalorder %s25, 3
      %p230 = scmp.ne.s32.totalorder %s225, %s227
      %p231 = scmp.eq.s32.totalorder %s25, 0
      %p232 = por %p230, %p231
      %p233 = scmp.ne.s32.totalorder %s225, %s227
      %p234 = scmp.eq.s32.totalorder %s30, 3
      %p235 = por %p233, %p234
      %p236 = scmp.ne.s32.totalorder %s227, %s228
      %p237 = scmp.eq.s32.totalorder %s30, 0
      %p238 = por %p236, %p237
      %p239 = scmp.ne.s32.totalorder %s227, %s228
      %p240 = scmp.eq.s32.totalorder %s31, 3
      %p241 = por %p239, %p240
      %p243 = scmp.ne.s32.totalorder %s228, %s242
      %p244 = scmp.eq.s32.totalorder %s31, 0
      %p245 = por %p243, %p244
      %s247 = sadd.s32 %s246, 1
      %p250 = scmp.eq.s32.totalorder %s25, 3
      %p251 = scmp.ne.s32.totalorder %s246, %s248
      %p252 = scmp.eq.s32.totalorder %s25, 0
      %p253 = por %p251, %p252
      %p254 = scmp.ne.s32.totalorder %s246, %s248
      %p255 = scmp.eq.s32.totalorder %s30, 3
      %p256 = por %p254, %p255
      %p257 = scmp.ne.s32.totalorder %s248, %s249
      %p258 = scmp.eq.s32.totalorder %s30, 0
      %p259 = por %p257, %p258
      %p260 = scmp.ne.s32.totalorder %s248, %s249
      %p261 = scmp.eq.s32.totalorder %s31, 3
      %p262 = por %p260, %p261
      %p264 = scmp.ne.s32.totalorder %s249, %s263
      %p265 = scmp.eq.s32.totalorder %s31, 0
      %p266 = por %p264, %p265
      %s267 = ssub.s32 %s32, %s44
      %s268 = ssub.s32 %s33, %s40
      %s269 = sor.u32 %s267, %s268
      %p270 = scmp.eq.s32.totalorder %s269, 0
      %s272 = sadd.s32 %s271, 1
      %s273 = scalar_select %p270, %s271, %s272
      %p276 = pneg %p270
      %p277 = scmp.eq.s32.totalorder %s25, 3
      %p278 = por %p276, %p277
      %p279 = scmp.ne.s32.totalorder %s271, %s274
      %p280 = scmp.eq.s32.totalorder %s25, 0
      %p281 = por %p279, %p280
      %p282 = scmp.ne.s32.totalorder %s271, %s274
      %p283 = scmp.eq.s32.totalorder %s30, 3
      %p284 = por %p282, %p283
      %p285 = scmp.ne.s32.totalorder %s274, %s275
      %p286 = scmp.eq.s32.totalorder %s30, 0
      %p287 = por %p285, %p286
      %p288 = scmp.ne.s32.totalorder %s274, %s275
      %p289 = scmp.eq.s32.totalorder %s31, 3
      %p290 = por %p288, %p289
      %p292 = scmp.ne.s32.totalorder %s275, %s291
      %p293 = scmp.eq.s32.totalorder %s31, 0
      %p294 = por %p292, %p293
      %p295 = scmp.le.s32.totalorder 1, %s25
      %p296 = scmp.lt.s32.totalorder %s25, 5
      %p297 = pnand %p295, %p296
      %p298 = pneg %p297
      // Predicated region
      $region9: #{tpu_custom_call.1} parent=5 // pred_check
        _
      $region10: #{tpu_custom_call.1} parent=5 // pred_check_branch
        %300 = sbr.rel (%p297) target = $region12
      $region11: #{tpu_custom_call.1} parent=5 // pred_region
        %s301 = ssub.s32 %s25, 1
        // Predicated region
        $region13: #{tpu_custom_call.1} parent=11 // pred_check
          %p302 = pneg %p112
        $region14: #{tpu_custom_call.1} parent=11 // pred_check_branch
          %304 = sbr.rel (%p302) target = $region16
        $region15: #{tpu_custom_call.1} parent=11 // pred_region
          _
        $region16: #{tpu_custom_call.1} parent=11 // pred_fallthru
          _
        // Predicated region
        $region17: #{tpu_custom_call.1} parent=11 // pred_check
          %p305 = pneg %p133
        $region18: #{tpu_custom_call.1} parent=11 // pred_check_branch
          %307 = sbr.rel (%p305) target = $region20
        $region19: #{tpu_custom_call.1} parent=11 // pred_region
          _
        $region20: #{tpu_custom_call.1} parent=11 // pred_fallthru
          _
        // Predicated region
        $region21: #{tpu_custom_call.1} parent=11 // pred_check
          %p308 = pneg %p154
        $region22: #{tpu_custom_call.1} parent=11 // pred_check_branch
          %310 = sbr.rel (%p308) target = $region24
        $region23: #{tpu_custom_call.1} parent=11 // pred_region
          _
        $region24: #{tpu_custom_call.1} parent=11 // pred_fallthru
          _
        // Predicated region
        $region25: #{tpu_custom_call.1} parent=11 // pred_check
          %p311 = pneg %p175
        $region26: #{tpu_custom_call.1} parent=11 // pred_check_branch
          %313 = sbr.rel (%p311) target = $region28
        $region27: #{tpu_custom_call.1} parent=11 // pred_region
          _
        $region28: #{tpu_custom_call.1} parent=11 // pred_fallthru
          _
        // Predicated region
        $region29: #{tpu_custom_call.1} parent=11 // pred_check
          %p314 = pneg %p196
        $region30: #{tpu_custom_call.1} parent=11 // pred_check_branch
          %316 = sbr.rel (%p314) target = $region32
        $region31: #{tpu_custom_call.1} parent=11 // pred_region
          _
        $region32: #{tpu_custom_call.1} parent=11 // pred_fallthru
          _
        // Predicated region
        $region33: #{tpu_custom_call.1} parent=11 // pred_check
          %p317 = pneg %p217
        $region34: #{tpu_custom_call.1} parent=11 // pred_check_branch
          %319 = sbr.rel (%p317) target = $region36
        $region35: #{tpu_custom_call.1} parent=11 // pred_region
          _
        $region36: #{tpu_custom_call.1} parent=11 // pred_fallthru
          _
        // Predicated region
        $region37: #{tpu_custom_call.1} parent=11 // pred_check
          %p320 = pneg %p238
        $region38: #{tpu_custom_call.1} parent=11 // pred_check_branch
          %322 = sbr.rel (%p320) target = $region40
        $region39: #{tpu_custom_call.1} parent=11 // pred_region
          _
        $region40: #{tpu_custom_call.1} parent=11 // pred_fallthru
          _
        // Predicated region
        $region41: #{tpu_custom_call.1} parent=11 // pred_check
          %p323 = pneg %p259
        $region42: #{tpu_custom_call.1} parent=11 // pred_check_branch
          %325 = sbr.rel (%p323) target = $region44
        $region43: #{tpu_custom_call.1} parent=11 // pred_region
          _
        $region44: #{tpu_custom_call.1} parent=11 // pred_fallthru
          _
      $region12: #{tpu_custom_call.1} parent=5 // pred_fallthru
        _
      %p326 = scmp.lt.s32.totalorder %s25, 4
      // Predicated region
      $region45: #{tpu_custom_call.1} parent=5 // pred_check
        %p327 = pneg %p326
      $region46: #{tpu_custom_call.1} parent=5 // pred_check_branch
        %329 = sbr.rel (%p327) target = $region48
      $region47: #{tpu_custom_call.1} parent=5 // pred_region
        // Predicated region
        $region49: #{tpu_custom_call.1} parent=47 // pred_check
          %p330 = pneg %p57
        $region50: #{tpu_custom_call.1} parent=47 // pred_check_branch
          %332 = sbr.rel (%p330) target = $region52
        $region51: #{tpu_custom_call.1} parent=47 // pred_region
          %s333 = sand.u32 %s47, 1
          %s334 = scalar_lea.sflag [#allocation5], %s333
          %s335 = sand.u32 %s47, 1
          %s336 = smul.addr %s335, 8
          %s337 = scalar_lea.vmem [#allocation4], %s336
          %339 = vsyncadd %s334, 0
          %s340 = smul.addr %s32, 2
          %s341 = smul.addr %s340, 4
          %s342 = scalar_lea.hbm %s0, %s341
          %s344 = sshll.u32 %s342, 4
          %s345 = int_to_ptr.hbm [resolvable:$true] %s344
          %s346 = sshll.u32 %s337, 4
          %s347 = int_to_ptr.vmem [resolvable:$true] %s346
          %349 = dma.hbm_to_vmem [thread:$0]  %s345, 128, %s347, %s334
        $region52: #{tpu_custom_call.1} parent=47 // pred_fallthru
          _
        // Predicated region
        $region53: #{tpu_custom_call.1} parent=47 // pred_check
          %p350 = pneg %p85
        $region54: #{tpu_custom_call.1} parent=47 // pred_check_branch
          %352 = sbr.rel (%p350) target = $region56
        $region55: #{tpu_custom_call.1} parent=47 // pred_region
          %s353 = sand.u32 %s75, 1
          %s354 = scalar_lea.sflag [#allocation8], %s353
          %s355 = sand.u32 %s75, 1
          %s356 = smul.addr %s355, 4
          %s357 = scalar_lea.vmem [#allocation7], %s356
          %359 = vsyncadd %s354, 0
          %s360 = smul.addr %s32, 2
          %s361 = sadd.s32 %s33, %s360
          %s362 = smul.addr %s361, 4
          %s363 = scalar_lea.hbm %s1, %s362
          %s365 = sshll.u32 %s363, 4
          %s366 = int_to_ptr.hbm [resolvable:$true] %s365
          %s367 = sshll.u32 %s357, 4
          %s368 = int_to_ptr.vmem [resolvable:$true] %s367
          %370 = dma.hbm_to_vmem [thread:$0]  %s366, 64, %s368, %s354
        $region56: #{tpu_custom_call.1} parent=47 // pred_fallthru
          _
      $region48: #{tpu_custom_call.1} parent=5 // pred_fallthru
        _
      %p371 = scmp.le.s32.totalorder 1, %s25
      %p372 = scmp.lt.s32.totalorder %s25, 5
      %p373 = pnand %p371, %p372
      %p374 = pneg %p373
      // Predicated region
      $region57: #{tpu_custom_call.1} parent=5 // pred_check
        _
      $region58: #{tpu_custom_call.1} parent=5 // pred_check_branch
        %376 = sbr.rel (%p373) target = $region60
      $region59: #{tpu_custom_call.1} parent=5 // pred_region
        %s377 = ssub.s32 %s25, 1
        %s378 = sand.u32 %s50, 1
        %s379 = scalar_lea.sflag [#allocation5], %s378
        %s380 = sand.u32 %s50, 1
        %s381 = smul.addr %s380, 8
        %s382 = scalar_lea.vmem [#allocation4], %s381
        // Predicated region
        $region61: #{tpu_custom_call.1} parent=59 // pred_check
          %p383 = pneg %p63
        $region62: #{tpu_custom_call.1} parent=59 // pred_check_branch
          %385 = sbr.rel (%p383) target = $region64
        $region63: #{tpu_custom_call.1} parent=59 // pred_region
          %387 = dma.done %s379, 128
        $region64: #{tpu_custom_call.1} parent=59 // pred_fallthru
          _
        %s388 = sand.u32 %s78, 1
        %s389 = scalar_lea.sflag [#allocation8], %s388
        %s390 = sand.u32 %s78, 1
        %s391 = smul.addr %s390, 4
        %s392 = scalar_lea.vmem [#allocation7], %s391
        // Predicated region
        $region65: #{tpu_custom_call.1} parent=59 // pred_check
          %p393 = pneg %p91
        $region66: #{tpu_custom_call.1} parent=59 // pred_check_branch
          %395 = sbr.rel (%p393) target = $region68
        $region67: #{tpu_custom_call.1} parent=59 // pred_region
          %397 = dma.done %s389, 64
        $region68: #{tpu_custom_call.1} parent=59 // pred_fallthru
          _
        %s398 = sand.u32 %s50, 1
        %s399 = scalar_lea.sflag [#allocation5], %s398
        %s400 = sand.u32 %s50, 1
        %s401 = smul.addr %s400, 8
        %s402 = scalar_lea.vmem [#allocation4], %s401
        %p403 = pneg %p63
        %p404 = pneg %p60
        %s405 = sand.u32 %s78, 1
        %s406 = scalar_lea.sflag [#allocation8], %s405
        %s407 = sand.u32 %s78, 1
        %s408 = smul.addr %s407, 4
        %s409 = scalar_lea.vmem [#allocation7], %s408
        %p410 = pneg %p91
        %p411 = pneg %p88
        %p412 = pneg %p112
        %p413 = pneg %p109
        %p414 = pneg %p133
        %p415 = pneg %p130
        %p416 = pneg %p154
        %p417 = pneg %p151
        %p418 = pneg %p175
        %p419 = pneg %p172
        %p420 = pneg %p196
        %p421 = pneg %p193
        %p422 = pneg %p217
        %p423 = pneg %p214
        %p424 = pneg %p238
        %p425 = pneg %p235
        %p426 = pneg %p259
        %p427 = pneg %p256
        %p428 = pneg %p287
        %p429 = pneg %p284
        %s430 = sand.u32 %s274, 1
        %s431 = scalar_lea.sflag [#allocation6], %s430
        %s432 = sand.u32 %s274, 1
        %s433 = smul.addr %s432, 4
        %s434 = scalar_lea.vmem [#allocation9], %s433
        %p435 = scmp.eq.s32.totalorder %s35, 0
        // Predicated region
        $region69: #{tpu_custom_call.1} parent=59 // pred_check
          %p436 = pneg %p435
        $region70: #{tpu_custom_call.1} parent=59 // pred_check_branch
          %438 = sbr.rel (%p436) target = $region72
        $region71: #{tpu_custom_call.1} parent=59 // pred_region
          %v439 = vld [vmem:[%s382] sm:$0xff]
          %v440 = vld [vmem:[%s3] sm:$0xf]
          %v441 = vld [vmem:[%s7] sm:$0xf]
          %443 = vset.pattern.permute.xlu0 0
          %444 = vperm.xlu0 %443, %v441
          %v445 = vpop.permute.xlu0 %444
          %448 = vst [vmem:[#allocation1] ss:$2 sm:$0xff] %v439
          %v449 = vld.sshfl [vmem:[#allocation1] sm:$0xff pattern:$0x75316420]
          %v450 = vld.sshfl [vmem:[#allocation1 + $0x8] sm:$0xff pattern:$0x75316420]
          %vm451 = vcmask 31744
          %v453 = vsel %vm451, %v440, 0
          %vm455 = vcmask 1043456
          %v456 = vsel %vm455, %v449, 0
          %v458 = vsel %vm455, %v450, 0
          %460 = vmatpush.msra.mxu0 0.0
          %461 = vmatpush.msra.mxu0 0.0
          %462 = vmatpush.msra.mxu0 0.0
          %463 = vmatpush.msra.mxu0 0.0
          %464 = vmatpush.msra.mxu0 0.0
          %465 = vmatpush.msra.mxu0 0.0
          %466 = vmatpush.msra.mxu0 0.0
          %467 = vmatpush.msra.mxu0 0.0
          %468 = vmatpush.msra.mxu0 0.0
          %469 = vmatpush.msra.mxu0 0.0
          %470 = vmatpush.msra.mxu0 0.0
          %471 = vmatpush.msra.mxu0 0.0
          %472 = vmatpush.msra.mxu0 0.0
          %473 = vmatpush.msra.mxu0 0.0
          %474 = vmatpush.msra.mxu0 0.0
          %475 = vmatpush.msra.mxu0 %v456
          %476 = vmatmul.f32.gmra.mxu0 %v453
          %v477 = vpop.f32.mrf.mxu0
          %v478 = vadd.f32 %v445, %v477
          %479 = vdwg.mxu0
          %480 = vmatpush.msra.mxu0 0.0
          %481 = vmatpush.msra.mxu0 0.0
          %482 = vmatpush.msra.mxu0 0.0
          %483 = vmatpush.msra.mxu0 0.0
          %484 = vmatpush.msra.mxu0 0.0
          %485 = vmatpush.msra.mxu0 0.0
          %486 = vmatpush.msra.mxu0 0.0
          %487 = vmatpush.msra.mxu0 0.0
          %488 = vmatpush.msra.mxu0 0.0
          %489 = vmatpush.msra.mxu0 0.0
          %490 = vmatpush.msra.mxu0 0.0
          %491 = vmatpush.msra.mxu0 0.0
          %492 = vmatpush.msra.mxu0 0.0
          %493 = vmatpush.msra.mxu0 0.0
          %494 = vmatpush.msra.mxu0 0.0
          %495 = vmatpush.msra.mxu0 %v458
          %496 = vmatmul.f32.gmra.mxu0 %v453
          %v497 = vpop.f32.mrf.mxu0
          %v498 = vadd.f32 %v445, %v497
          %499 = vdwg.mxu0
          %v500 = vld [vmem:[%s4] sm:$0xf]
          %v501 = vld [vmem:[%s8] sm:$0xf]
          %503 = vset.pattern.permute.xlu0 0
          %504 = vperm.xlu0 %503, %v501
          %v505 = vpop.permute.xlu0 %504
          %507 = vst [vmem:[#allocation1] ss:$2 sm:$0xff] %v439
          %v508 = vld.sshfl [vmem:[#allocation1] sm:$0xff pattern:$0x75316420]
          %v509 = vld.sshfl [vmem:[#allocation1 + $0x8] sm:$0xff pattern:$0x75316420]
          %v511 = vsel %vm451, %v500, 0
          %v513 = vsel %vm455, %v508, 0
          %v515 = vsel %vm455, %v509, 0
          %517 = vmatpush.msra.mxu0 0.0
          %518 = vmatpush.msra.mxu0 0.0
          %519 = vmatpush.msra.mxu0 0.0
          %520 = vmatpush.msra.mxu0 0.0
          %521 = vmatpush.msra.mxu0 0.0
          %522 = vmatpush.msra.mxu0 0.0
          %523 = vmatpush.msra.mxu0 0.0
          %524 = vmatpush.msra.mxu0 0.0
          %525 = vmatpush.msra.mxu0 0.0
          %526 = vmatpush.msra.mxu0 0.0
          %527 = vmatpush.msra.mxu0 0.0
          %528 = vmatpush.msra.mxu0 0.0
          %529 = vmatpush.msra.mxu0 0.0
          %530 = vmatpush.msra.mxu0 0.0
          %531 = vmatpush.msra.mxu0 0.0
          %532 = vmatpush.msra.mxu0 %v513
          %533 = vmatmul.f32.gmra.mxu0 %v511
          %v534 = vpop.f32.mrf.mxu0
          %v535 = vadd.f32 %v505, %v534
          %536 = vdwg.mxu0
          %537 = vmatpush.msra.mxu0 0.0
          %538 = vmatpush.msra.mxu0 0.0
          %539 = vmatpush.msra.mxu0 0.0
          %540 = vmatpush.msra.mxu0 0.0
          %541 = vmatpush.msra.mxu0 0.0
          %542 = vmatpush.msra.mxu0 0.0
          %543 = vmatpush.msra.mxu0 0.0
          %544 = vmatpush.msra.mxu0 0.0
          %545 = vmatpush.msra.mxu0 0.0
          %546 = vmatpush.msra.mxu0 0.0
          %547 = vmatpush.msra.mxu0 0.0
          %548 = vmatpush.msra.mxu0 0.0
          %549 = vmatpush.msra.mxu0 0.0
          %550 = vmatpush.msra.mxu0 0.0
          %551 = vmatpush.msra.mxu0 0.0
          %552 = vmatpush.msra.mxu0 %v515
          %553 = vmatmul.f32.gmra.mxu0 %v511
          %v554 = vpop.f32.mrf.mxu0
          %v555 = vadd.f32 %v505, %v554
          %556 = vdwg.mxu0
          %v559 = vrot.slane %v498, 4
          %v560 = vsel %vm455, %v478, %v559
          %562 = vst [vmem:[#allocation2] sm:$0xff] %v560
          %v565 = vrot.slane %v555, 4
          %v566 = vsel %vm455, %v535, %v565
          %568 = vst [vmem:[#allocation3] sm:$0xff] %v566
        $region72: #{tpu_custom_call.1} parent=59 // pred_fallthru
          _
        %v569 = vld [vmem:[%s392] sm:$0xf]
        %v570 = vld [vmem:[%s2] sm:$0xf]
        %v571 = vld [vmem:[%s6] sm:$0xf]
        %573 = vset.pattern.permute.xlu0 0
        %574 = vperm.xlu0 %573, %v571
        %v575 = vpop.permute.xlu0 %574
        %vm577 = vcmask 31744
        %v579 = vsel %vm577, %v570, 0
        %vm581 = vcmask 1043456
        %v583 = vsel %vm581, %v569, 0
        %585 = vmatpush.msra.mxu0 0.0
        %586 = vmatpush.msra.mxu0 0.0
        %587 = vmatpush.msra.mxu0 0.0
        %588 = vmatpush.msra.mxu0 0.0
        %589 = vmatpush.msra.mxu0 0.0
        %590 = vmatpush.msra.mxu0 0.0
        %591 = vmatpush.msra.mxu0 0.0
        %592 = vmatpush.msra.mxu0 0.0
        %593 = vmatpush.msra.mxu0 0.0
        %594 = vmatpush.msra.mxu0 0.0
        %595 = vmatpush.msra.mxu0 0.0
        %596 = vmatpush.msra.mxu0 0.0
        %597 = vmatpush.msra.mxu0 0.0
        %598 = vmatpush.msra.mxu0 0.0
        %599 = vmatpush.msra.mxu0 0.0
        %600 = vmatpush.msra.mxu0 %v583
        %601 = vmatmul.f32.gmra.mxu0 %v579
        %v602 = vpop.f32.mrf.mxu0
        %v603 = vadd.f32 %v575, %v602
        %604 = vdwg.mxu0
        %v605 = vld [vmem:[#allocation2] sm:$0xff]
        %v606 = vld [vmem:[#allocation3] sm:$0xff]
        %607 = vxpose.xlu0.b32.start [1/16] %v603, 128
        %608 = vxpose.xlu0.b32.cont [2/16] 0.0, 128
        %609 = vxpose.xlu0.b32.cont [3/16] 0.0, 128
        %610 = vxpose.xlu0.b32.cont [4/16] 0.0, 128
        %611 = vxpose.xlu0.b32.cont [5/16] 0.0, 128
        %612 = vxpose.xlu0.b32.cont [6/16] 0.0, 128
        %613 = vxpose.xlu0.b32.cont [7/16] 0.0, 128
        %614 = vxpose.xlu0.b32.cont [8/16] 0.0, 128
        %615 = vxpose.xlu0.b32.cont [9/16] 0.0, 128
        %616 = vxpose.xlu0.b32.cont [10/16] 0.0, 128
        %617 = vxpose.xlu0.b32.cont [11/16] 0.0, 128
        %618 = vxpose.xlu0.b32.cont [12/16] 0.0, 128
        %619 = vxpose.xlu0.b32.cont [13/16] 0.0, 128
        %620 = vxpose.xlu0.b32.cont [14/16] 0.0, 128
        %621 = vxpose.xlu0.b32.cont [15/16] 0.0, 128
        %622 = vxpose.xlu0.b32.end [16/16] 0.0, 128
        %v623 = vpop.trf.xlu0
        %v624 = vpop.trf.xlu0
        %v625 = vpop.trf.xlu0
        %v626 = vpop.trf.xlu0
        %v627 = vpop.trf.xlu0
        %v628 = vpop.trf.xlu0
        %v629 = vpop.trf.xlu0
        %v630 = vpop.trf.xlu0
        %v631 = vpop.trf.xlu0
        %v632 = vpop.trf.xlu0
        %v633 = vpop.trf.xlu0
        %v634 = vpop.trf.xlu0
        %v635 = vpop.trf.xlu0
        %v636 = vpop.trf.xlu0
        %v637 = vpop.trf.xlu0
        %v638 = vpop.trf.xlu0
        %640 = vst [vmem:[#allocation1] ss:$2 sm:$0xff] %v605
        %v641 = vld.sshfl [vmem:[#allocation1] sm:$0xff pattern:$0x75316420]
        %v642 = vld.sshfl [vmem:[#allocation1 + $0x8] sm:$0xff pattern:$0x75316420]
        %v644 = vsel %vm577, %v623, 0
        %v647 = vsel %vm577, %v624, 0
        %v650 = vsel %vm577, %v625, 0
        %v653 = vsel %vm577, %v626, 0
        %v656 = vsel %vm577, %v627, 0
        %v659 = vsel %vm577, %v628, 0
        %v662 = vsel %vm577, %v629, 0
        %v665 = vsel %vm577, %v630, 0
        %v668 = vsel %vm577, %v631, 0
        %v671 = vsel %vm577, %v632, 0
        %v674 = vsel %vm577, %v633, 0
        %v677 = vsel %vm577, %v634, 0
        %v680 = vsel %vm577, %v635, 0
        %v683 = vsel %vm577, %v636, 0
        %v686 = vsel %vm577, %v637, 0
        %v689 = vsel %vm577, %v638, 0
        %v691 = vsel %vm581, %v641, 0
        %v693 = vsel %vm581, %v642, 0
        %695 = vmatpush.msra.mxu0 0.0
        %696 = vmatpush.msra.mxu0 0.0
        %697 = vmatpush.msra.mxu0 0.0
        %698 = vmatpush.msra.mxu0 0.0
        %699 = vmatpush.msra.mxu0 0.0
        %700 = vmatpush.msra.mxu0 0.0
        %701 = vmatpush.msra.mxu0 0.0
        %702 = vmatpush.msra.mxu0 0.0
        %703 = vmatpush.msra.mxu0 0.0
        %704 = vmatpush.msra.mxu0 0.0
        %705 = vmatpush.msra.mxu0 0.0
        %706 = vmatpush.msra.mxu0 0.0
        %707 = vmatpush.msra.mxu0 0.0
        %708 = vmatpush.msra.mxu0 0.0
        %709 = vmatpush.msra.mxu0 0.0
        %710 = vmatpush.msra.mxu0 %v691
        %711 = vmatmul.f32.gmra.mxu0 %v644
        %v712 = vpop.f32.mrf.mxu0
        %v713 = vadd.f32 0.0, %v712
        %714 = vmatmul.f32.gmra.mxu0 %v647
        %v715 = vpop.f32.mrf.mxu0
        %v716 = vadd.f32 0.0, %v715
        %717 = vmatmul.f32.gmra.mxu0 %v650
        %v718 = vpop.f32.mrf.mxu0
        %v719 = vadd.f32 0.0, %v718
        %720 = vmatmul.f32.gmra.mxu0 %v653
        %v721 = vpop.f32.mrf.mxu0
        %v722 = vadd.f32 0.0, %v721
        %723 = vmatmul.f32.gmra.mxu0 %v656
        %v724 = vpop.f32.mrf.mxu0
        %v725 = vadd.f32 0.0, %v724
        %726 = vmatmul.f32.gmra.mxu0 %v659
        %v727 = vpop.f32.mrf.mxu0
        %v728 = vadd.f32 0.0, %v727
        %729 = vmatmul.f32.gmra.mxu0 %v662
        %v730 = vpop.f32.mrf.mxu0
        %v731 = vadd.f32 0.0, %v730
        %732 = vmatmul.f32.gmra.mxu0 %v665
        %v733 = vpop.f32.mrf.mxu0
        %v734 = vadd.f32 0.0, %v733
        %735 = vmatmul.f32.gmra.mxu0 %v668
        %v736 = vpop.f32.mrf.mxu0
        %v737 = vadd.f32 0.0, %v736
        %738 = vmatmul.f32.gmra.mxu0 %v671
        %v739 = vpop.f32.mrf.mxu0
        %v740 = vadd.f32 0.0, %v739
        %741 = vmatmul.f32.gmra.mxu0 %v674
        %v742 = vpop.f32.mrf.mxu0
        %v743 = vadd.f32 0.0, %v742
        %744 = vmatmul.f32.gmra.mxu0 %v677
        %v745 = vpop.f32.mrf.mxu0
        %v746 = vadd.f32 0.0, %v745
        %747 = vmatmul.f32.gmra.mxu0 %v680
        %v748 = vpop.f32.mrf.mxu0
        %v749 = vadd.f32 0.0, %v748
        %750 = vmatmul.f32.gmra.mxu0 %v683
        %v751 = vpop.f32.mrf.mxu0
        %v752 = vadd.f32 0.0, %v751
        %753 = vmatmul.f32.gmra.mxu0 %v686
        %v754 = vpop.f32.mrf.mxu0
        %v755 = vadd.f32 0.0, %v754
        %756 = vmatmul.f32.gmra.mxu0 %v689
        %v757 = vpop.f32.mrf.mxu0
        %v758 = vadd.f32 0.0, %v757
        %759 = vdwg.mxu0
        %760 = vmatpush.msra.mxu0 0.0
        %761 = vmatpush.msra.mxu0 0.0
        %762 = vmatpush.msra.mxu0 0.0
        %763 = vmatpush.msra.mxu0 0.0
        %764 = vmatpush.msra.mxu0 0.0
        %765 = vmatpush.msra.mxu0 0.0
        %766 = vmatpush.msra.mxu0 0.0
        %767 = vmatpush.msra.mxu0 0.0
        %768 = vmatpush.msra.mxu0 0.0
        %769 = vmatpush.msra.mxu0 0.0
        %770 = vmatpush.msra.mxu0 0.0
        %771 = vmatpush.msra.mxu0 0.0
        %772 = vmatpush.msra.mxu0 0.0
        %773 = vmatpush.msra.mxu0 0.0
        %774 = vmatpush.msra.mxu0 0.0
        %775 = vmatpush.msra.mxu0 %v693
        %776 = vmatmul.f32.gmra.mxu0 %v644
        %v777 = vpop.f32.mrf.mxu0
        %v778 = vadd.f32 0.0, %v777
        %779 = vmatmul.f32.gmra.mxu0 %v647
        %v780 = vpop.f32.mrf.mxu0
        %v781 = vadd.f32 0.0, %v780
        %782 = vmatmul.f32.gmra.mxu0 %v650
        %v783 = vpop.f32.mrf.mxu0
        %v784 = vadd.f32 0.0, %v783
        %785 = vmatmul.f32.gmra.mxu0 %v653
        %v786 = vpop.f32.mrf.mxu0
        %v787 = vadd.f32 0.0, %v786
        %788 = vmatmul.f32.gmra.mxu0 %v656
        %v789 = vpop.f32.mrf.mxu0
        %v790 = vadd.f32 0.0, %v789
        %791 = vmatmul.f32.gmra.mxu0 %v659
        %v792 = vpop.f32.mrf.mxu0
        %v793 = vadd.f32 0.0, %v792
        %794 = vmatmul.f32.gmra.mxu0 %v662
        %v795 = vpop.f32.mrf.mxu0
        %v796 = vadd.f32 0.0, %v795
        %797 = vmatmul.f32.gmra.mxu0 %v665
        %v798 = vpop.f32.mrf.mxu0
        %v799 = vadd.f32 0.0, %v798
        %800 = vmatmul.f32.gmra.mxu0 %v668
        %v801 = vpop.f32.mrf.mxu0
        %v802 = vadd.f32 0.0, %v801
        %803 = vmatmul.f32.gmra.mxu0 %v671
        %v804 = vpop.f32.mrf.mxu0
        %v805 = vadd.f32 0.0, %v804
        %806 = vmatmul.f32.gmra.mxu0 %v674
        %v807 = vpop.f32.mrf.mxu0
        %v808 = vadd.f32 0.0, %v807
        %809 = vmatmul.f32.gmra.mxu0 %v677
        %v810 = vpop.f32.mrf.mxu0
        %v811 = vadd.f32 0.0, %v810
        %812 = vmatmul.f32.gmra.mxu0 %v680
        %v813 = vpop.f32.mrf.mxu0
        %v814 = vadd.f32 0.0, %v813
        %815 = vmatmul.f32.gmra.mxu0 %v683
        %v816 = vpop.f32.mrf.mxu0
        %v817 = vadd.f32 0.0, %v816
        %818 = vmatmul.f32.gmra.mxu0 %v686
        %v819 = vpop.f32.mrf.mxu0
        %v820 = vadd.f32 0.0, %v819
        %821 = vmatmul.f32.gmra.mxu0 %v689
        %v822 = vpop.f32.mrf.mxu0
        %v823 = vadd.f32 0.0, %v822
        %824 = vdwg.mxu0
        %v825 = vmul.f32 %v713, 0.5
        %v826 = vmul.f32 %v778, 0.5
        %v827 = vmul.f32 %v716, 0.5
        %v828 = vmul.f32 %v781, 0.5
        %v829 = vmul.f32 %v719, 0.5
        %v830 = vmul.f32 %v784, 0.5
        %v831 = vmul.f32 %v722, 0.5
        %v832 = vmul.f32 %v787, 0.5
        %v833 = vmul.f32 %v725, 0.5
        %v834 = vmul.f32 %v790, 0.5
        %v835 = vmul.f32 %v728, 0.5
        %v836 = vmul.f32 %v793, 0.5
        %v837 = vmul.f32 %v731, 0.5
        %v838 = vmul.f32 %v796, 0.5
        %v839 = vmul.f32 %v734, 0.5
        %v840 = vmul.f32 %v799, 0.5
        %v841 = vmul.f32 %v737, 0.5
        %v842 = vmul.f32 %v802, 0.5
        %v843 = vmul.f32 %v740, 0.5
        %v844 = vmul.f32 %v805, 0.5
        %v845 = vmul.f32 %v743, 0.5
        %v846 = vmul.f32 %v808, 0.5
        %v847 = vmul.f32 %v746, 0.5
        %v848 = vmul.f32 %v811, 0.5
        %v849 = vmul.f32 %v749, 0.5
        %v850 = vmul.f32 %v814, 0.5
        %v851 = vmul.f32 %v752, 0.5
        %v852 = vmul.f32 %v817, 0.5
        %v853 = vmul.f32 %v755, 0.5
        %v854 = vmul.f32 %v820, 0.5
        %v855 = vmul.f32 %v758, 0.5
        %v856 = vmul.f32 %v823, 0.5
        %v857 = vmax.f32 %v825, %v826
        %858 = vmax.xlane.f32.xlu0 %v857
        %v859 = vpop.xlane.xlu0 %858
        %v860 = vmax.f32 %v827, %v828
        %861 = vmax.xlane.f32.xlu0 %v860
        %v862 = vpop.xlane.xlu0 %861
        %v863 = vmax.f32 %v829, %v830
        %864 = vmax.xlane.f32.xlu0 %v863
        %v865 = vpop.xlane.xlu0 %864
        %v866 = vmax.f32 %v831, %v832
        %867 = vmax.xlane.f32.xlu0 %v866
        %v868 = vpop.xlane.xlu0 %867
        %v869 = vmax.f32 %v833, %v834
        %870 = vmax.xlane.f32.xlu0 %v869
        %v871 = vpop.xlane.xlu0 %870
        %v872 = vmax.f32 %v835, %v836
        %873 = vmax.xlane.f32.xlu0 %v872
        %v874 = vpop.xlane.xlu0 %873
        %v875 = vmax.f32 %v837, %v838
        %876 = vmax.xlane.f32.xlu0 %v875
        %v877 = vpop.xlane.xlu0 %876
        %v878 = vmax.f32 %v839, %v840
        %879 = vmax.xlane.f32.xlu0 %v878
        %v880 = vpop.xlane.xlu0 %879
        %v881 = vmax.f32 %v841, %v842
        %882 = vmax.xlane.f32.xlu0 %v881
        %v883 = vpop.xlane.xlu0 %882
        %v884 = vmax.f32 %v843, %v844
        %885 = vmax.xlane.f32.xlu0 %v884
        %v886 = vpop.xlane.xlu0 %885
        %v887 = vmax.f32 %v845, %v846
        %888 = vmax.xlane.f32.xlu0 %v887
        %v889 = vpop.xlane.xlu0 %888
        %v890 = vmax.f32 %v847, %v848
        %891 = vmax.xlane.f32.xlu0 %v890
        %v892 = vpop.xlane.xlu0 %891
        %v893 = vmax.f32 %v849, %v850
        %894 = vmax.xlane.f32.xlu0 %v893
        %v895 = vpop.xlane.xlu0 %894
        %v896 = vmax.f32 %v851, %v852
        %897 = vmax.xlane.f32.xlu0 %v896
        %v898 = vpop.xlane.xlu0 %897
        %v899 = vmax.f32 %v853, %v854
        %900 = vmax.xlane.f32.xlu0 %v899
        %v901 = vpop.xlane.xlu0 %900
        %v902 = vmax.f32 %v855, %v856
        %903 = vmax.xlane.f32.xlu0 %v902
        %v904 = vpop.xlane.xlu0 %903
        %v905 = vsub.f32 %v825, %v859
        %v906 = vsub.f32 %v826, %v859
        %v907 = vsub.f32 %v827, %v862
        %v908 = vsub.f32 %v828, %v862
        %v909 = vsub.f32 %v829, %v865
        %v910 = vsub.f32 %v830, %v865
        %v911 = vsub.f32 %v831, %v868
        %v912 = vsub.f32 %v832, %v868
        %v913 = vsub.f32 %v833, %v871
        %v914 = vsub.f32 %v834, %v871
        %v915 = vsub.f32 %v835, %v874
        %v916 = vsub.f32 %v836, %v874
        %v917 = vsub.f32 %v837, %v877
        %v918 = vsub.f32 %v838, %v877
        %v919 = vsub.f32 %v839, %v880
        %v920 = vsub.f32 %v840, %v880
        %v921 = vsub.f32 %v841, %v883
        %v922 = vsub.f32 %v842, %v883
        %v923 = vsub.f32 %v843, %v886
        %v924 = vsub.f32 %v844, %v886
        %v925 = vsub.f32 %v845, %v889
        %v926 = vsub.f32 %v846, %v889
        %v927 = vsub.f32 %v847, %v892
        %v928 = vsub.f32 %v848, %v892
        %v929 = vsub.f32 %v849, %v895
        %v930 = vsub.f32 %v850, %v895
        %v931 = vsub.f32 %v851, %v898
        %v932 = vsub.f32 %v852, %v898
        %v933 = vsub.f32 %v853, %v901
        %v934 = vsub.f32 %v854, %v901
        %v935 = vsub.f32 %v855, %v904
        %v936 = vsub.f32 %v856, %v904
        %v937 = vmul.f32 %v905, 1.442695
        %v938 = vpow.pop %v937
        %v939 = vmul.f32 %v906, 1.442695
        %v940 = vpow.pop %v939
        %v941 = vmul.f32 %v907, 1.442695
        %v942 = vpow.pop %v941
        %v943 = vmul.f32 %v908, 1.442695
        %v944 = vpow.pop %v943
        %v945 = vmul.f32 %v909, 1.442695
        %v946 = vpow.pop %v945
        %v947 = vmul.f32 %v910, 1.442695
        %v948 = vpow.pop %v947
        %v949 = vmul.f32 %v911, 1.442695
        %v950 = vpow.pop %v949
        %v951 = vmul.f32 %v912, 1.442695
        %v952 = vpow.pop %v951
        %v953 = vmul.f32 %v913, 1.442695
        %v954 = vpow.pop %v953
        %v955 = vmul.f32 %v914, 1.442695
        %v956 = vpow.pop %v955
        %v957 = vmul.f32 %v915, 1.442695
        %v958 = vpow.pop %v957
        %v959 = vmul.f32 %v916, 1.442695
        %v960 = vpow.pop %v959
        %v961 = vmul.f32 %v917, 1.442695
        %v962 = vpow.pop %v961
        %v963 = vmul.f32 %v918, 1.442695
        %v964 = vpow.pop %v963
        %v965 = vmul.f32 %v919, 1.442695
        %v966 = vpow.pop %v965
        %v967 = vmul.f32 %v920, 1.442695
        %v968 = vpow.pop %v967
        %v969 = vmul.f32 %v921, 1.442695
        %v970 = vpow.pop %v969
        %v971 = vmul.f32 %v922, 1.442695
        %v972 = vpow.pop %v971
        %v973 = vmul.f32 %v923, 1.442695
        %v974 = vpow.pop %v973
        %v975 = vmul.f32 %v924, 1.442695
        %v976 = vpow.pop %v975
        %v977 = vmul.f32 %v925, 1.442695
        %v978 = vpow.pop %v977
        %v979 = vmul.f32 %v926, 1.442695
        %v980 = vpow.pop %v979
        %v981 = vmul.f32 %v927, 1.442695
        %v982 = vpow.pop %v981
        %v983 = vmul.f32 %v928, 1.442695
        %v984 = vpow.pop %v983
        %v985 = vmul.f32 %v929, 1.442695
        %v986 = vpow.pop %v985
        %v987 = vmul.f32 %v930, 1.442695
        %v988 = vpow.pop %v987
        %v989 = vmul.f32 %v931, 1.442695
        %v990 = vpow.pop %v989
        %v991 = vmul.f32 %v932, 1.442695
        %v992 = vpow.pop %v991
        %v993 = vmul.f32 %v933, 1.442695
        %v994 = vpow.pop %v993
        %v995 = vmul.f32 %v934, 1.442695
        %v996 = vpow.pop %v995
        %v997 = vmul.f32 %v935, 1.442695
        %v998 = vpow.pop %v997
        %v999 = vmul.f32 %v936, 1.442695
        %v1000 = vpow.pop %v999
        %v1001 = vadd.f32 %v938, %v940
        %1002 = vadd.xlane.f32.xlu0 %v1001
        %v1003 = vpop.xlane.xlu0 %1002
        %v1004 = vadd.f32 %v942, %v944
        %1005 = vadd.xlane.f32.xlu0 %v1004
        %v1006 = vpop.xlane.xlu0 %1005
        %v1007 = vadd.f32 %v946, %v948
        %1008 = vadd.xlane.f32.xlu0 %v1007
        %v1009 = vpop.xlane.xlu0 %1008
        %v1010 = vadd.f32 %v950, %v952
        %1011 = vadd.xlane.f32.xlu0 %v1010
        %v1012 = vpop.xlane.xlu0 %1011
        %v1013 = vadd.f32 %v954, %v956
        %1014 = vadd.xlane.f32.xlu0 %v1013
        %v1015 = vpop.xlane.xlu0 %1014
        %v1016 = vadd.f32 %v958, %v960
        %1017 = vadd.xlane.f32.xlu0 %v1016
        %v1018 = vpop.xlane.xlu0 %1017
        %v1019 = vadd.f32 %v962, %v964
        %1020 = vadd.xlane.f32.xlu0 %v1019
        %v1021 = vpop.xlane.xlu0 %1020
        %v1022 = vadd.f32 %v966, %v968
        %1023 = vadd.xlane.f32.xlu0 %v1022
        %v1024 = vpop.xlane.xlu0 %1023
        %v1025 = vadd.f32 %v970, %v972
        %1026 = vadd.xlane.f32.xlu0 %v1025
        %v1027 = vpop.xlane.xlu0 %1026
        %v1028 = vadd.f32 %v974, %v976
        %1029 = vadd.xlane.f32.xlu0 %v1028
        %v1030 = vpop.xlane.xlu0 %1029
        %v1031 = vadd.f32 %v978, %v980
        %1032 = vadd.xlane.f32.xlu0 %v1031
        %v1033 = vpop.xlane.xlu0 %1032
        %v1034 = vadd.f32 %v982, %v984
        %1035 = vadd.xlane.f32.xlu0 %v1034
        %v1036 = vpop.xlane.xlu0 %1035
        %v1037 = vadd.f32 %v986, %v988
        %1038 = vadd.xlane.f32.xlu0 %v1037
        %v1039 = vpop.xlane.xlu0 %1038
        %v1040 = vadd.f32 %v990, %v992
        %1041 = vadd.xlane.f32.xlu0 %v1040
        %v1042 = vpop.xlane.xlu0 %1041
        %v1043 = vadd.f32 %v994, %v996
        %1044 = vadd.xlane.f32.xlu0 %v1043
        %v1045 = vpop.xlane.xlu0 %1044
        %v1046 = vadd.f32 %v998, %v1000
        %1047 = vadd.xlane.f32.xlu0 %v1046
        %v1048 = vpop.xlane.xlu0 %1047
        %v1049 = vrcp.pop %v1003
        %v1050 = vmul.f32 %v1003, %v1049
        %v1051 = vsub.f32 1.0, %v1050
        %v1052 = vmul.f32 %v1049, %v1051
        %v1053 = vadd.f32 %v1049, %v1052
        %vm1054 = vweird.f32 %v1003
        %vm1055 = vweird.f32 %v1049
        %vm1056 = vmor %vm1054, %vm1055
        %v1057 = vsel %vm1056, %v1049, %v1053
        %v1058 = vand.u32 2147483647, %v1003
        %vm1059 = vcmp.eq.f32.partialorder %v1058, 8.507059e+37
        %v1060 = vand.u32 %v1003, 2147483648
        %v1061 = vor.u32 1.1754944e-38, %v1060
        %v1062 = vsel %vm1059, %v1061, %v1057
        %v1063 = vrcp.pop %v1006
        %v1064 = vmul.f32 %v1006, %v1063
        %v1065 = vsub.f32 1.0, %v1064
        %v1066 = vmul.f32 %v1063, %v1065
        %v1067 = vadd.f32 %v1063, %v1066
        %vm1068 = vweird.f32 %v1006
        %vm1069 = vweird.f32 %v1063
        %vm1070 = vmor %vm1068, %vm1069
        %v1071 = vsel %vm1070, %v1063, %v1067
        %v1072 = vand.u32 2147483647, %v1006
        %vm1073 = vcmp.eq.f32.partialorder %v1072, 8.507059e+37
        %v1074 = vand.u32 %v1006, 2147483648
        %v1075 = vor.u32 1.1754944e-38, %v1074
        %v1076 = vsel %vm1073, %v1075, %v1071
        %v1077 = vrcp.pop %v1009
        %v1078 = vmul.f32 %v1009, %v1077
        %v1079 = vsub.f32 1.0, %v1078
        %v1080 = vmul.f32 %v1077, %v1079
        %v1081 = vadd.f32 %v1077, %v1080
        %vm1082 = vweird.f32 %v1009
        %vm1083 = vweird.f32 %v1077
        %vm1084 = vmor %vm1082, %vm1083
        %v1085 = vsel %vm1084, %v1077, %v1081
        %v1086 = vand.u32 2147483647, %v1009
        %vm1087 = vcmp.eq.f32.partialorder %v1086, 8.507059e+37
        %v1088 = vand.u32 %v1009, 2147483648
        %v1089 = vor.u32 1.1754944e-38, %v1088
        %v1090 = vsel %vm1087, %v1089, %v1085
        %v1091 = vrcp.pop %v1012
        %v1092 = vmul.f32 %v1012, %v1091
        %v1093 = vsub.f32 1.0, %v1092
        %v1094 = vmul.f32 %v1091, %v1093
        %v1095 = vadd.f32 %v1091, %v1094
        %vm1096 = vweird.f32 %v1012
        %vm1097 = vweird.f32 %v1091
        %vm1098 = vmor %vm1096, %vm1097
        %v1099 = vsel %vm1098, %v1091, %v1095
        %v1100 = vand.u32 2147483647, %v1012
        %vm1101 = vcmp.eq.f32.partialorder %v1100, 8.507059e+37
        %v1102 = vand.u32 %v1012, 2147483648
        %v1103 = vor.u32 1.1754944e-38, %v1102
        %v1104 = vsel %vm1101, %v1103, %v1099
        %v1105 = vrcp.pop %v1015
        %v1106 = vmul.f32 %v1015, %v1105
        %v1107 = vsub.f32 1.0, %v1106
        %v1108 = vmul.f32 %v1105, %v1107
        %v1109 = vadd.f32 %v1105, %v1108
        %vm1110 = vweird.f32 %v1015
        %vm1111 = vweird.f32 %v1105
        %vm1112 = vmor %vm1110, %vm1111
        %v1113 = vsel %vm1112, %v1105, %v1109
        %v1114 = vand.u32 2147483647, %v1015
        %vm1115 = vcmp.eq.f32.partialorder %v1114, 8.507059e+37
        %v1116 = vand.u32 %v1015, 2147483648
        %v1117 = vor.u32 1.1754944e-38, %v1116
        %v1118 = vsel %vm1115, %v1117, %v1113
        %v1119 = vrcp.pop %v1018
        %v1120 = vmul.f32 %v1018, %v1119
        %v1121 = vsub.f32 1.0, %v1120
        %v1122 = vmul.f32 %v1119, %v1121
        %v1123 = vadd.f32 %v1119, %v1122
        %vm1124 = vweird.f32 %v1018
        %vm1125 = vweird.f32 %v1119
        %vm1126 = vmor %vm1124, %vm1125
        %v1127 = vsel %vm1126, %v1119, %v1123
        %v1128 = vand.u32 2147483647, %v1018
        %vm1129 = vcmp.eq.f32.partialorder %v1128, 8.507059e+37
        %v1130 = vand.u32 %v1018, 2147483648
        %v1131 = vor.u32 1.1754944e-38, %v1130
        %v1132 = vsel %vm1129, %v1131, %v1127
        %v1133 = vrcp.pop %v1021
        %v1134 = vmul.f32 %v1021, %v1133
        %v1135 = vsub.f32 1.0, %v1134
        %v1136 = vmul.f32 %v1133, %v1135
        %v1137 = vadd.f32 %v1133, %v1136
        %vm1138 = vweird.f32 %v1021
        %vm1139 = vweird.f32 %v1133
        %vm1140 = vmor %vm1138, %vm1139
        %v1141 = vsel %vm1140, %v1133, %v1137
        %v1142 = vand.u32 2147483647, %v1021
        %vm1143 = vcmp.eq.f32.partialorder %v1142, 8.507059e+37
        %v1144 = vand.u32 %v1021, 2147483648
        %v1145 = vor.u32 1.1754944e-38, %v1144
        %v1146 = vsel %vm1143, %v1145, %v1141
        %v1147 = vrcp.pop %v1024
        %v1148 = vmul.f32 %v1024, %v1147
        %v1149 = vsub.f32 1.0, %v1148
        %v1150 = vmul.f32 %v1147, %v1149
        %v1151 = vadd.f32 %v1147, %v1150
        %vm1152 = vweird.f32 %v1024
        %vm1153 = vweird.f32 %v1147
        %vm1154 = vmor %vm1152, %vm1153
        %v1155 = vsel %vm1154, %v1147, %v1151
        %v1156 = vand.u32 2147483647, %v1024
        %vm1157 = vcmp.eq.f32.partialorder %v1156, 8.507059e+37
        %v1158 = vand.u32 %v1024, 2147483648
        %v1159 = vor.u32 1.1754944e-38, %v1158
        %v1160 = vsel %vm1157, %v1159, %v1155
        %v1161 = vrcp.pop %v1027
        %v1162 = vmul.f32 %v1027, %v1161
        %v1163 = vsub.f32 1.0, %v1162
        %v1164 = vmul.f32 %v1161, %v1163
        %v1165 = vadd.f32 %v1161, %v1164
        %vm1166 = vweird.f32 %v1027
        %vm1167 = vweird.f32 %v1161
        %vm1168 = vmor %vm1166, %vm1167
        %v1169 = vsel %vm1168, %v1161, %v1165
        %v1170 = vand.u32 2147483647, %v1027
        %vm1171 = vcmp.eq.f32.partialorder %v1170, 8.507059e+37
        %v1172 = vand.u32 %v1027, 2147483648
        %v1173 = vor.u32 1.1754944e-38, %v1172
        %v1174 = vsel %vm1171, %v1173, %v1169
        %v1175 = vrcp.pop %v1030
        %v1176 = vmul.f32 %v1030, %v1175
        %v1177 = vsub.f32 1.0, %v1176
        %v1178 = vmul.f32 %v1175, %v1177
        %v1179 = vadd.f32 %v1175, %v1178
        %vm1180 = vweird.f32 %v1030
        %vm1181 = vweird.f32 %v1175
        %vm1182 = vmor %vm1180, %vm1181
        %v1183 = vsel %vm1182, %v1175, %v1179
        %v1184 = vand.u32 2147483647, %v1030
        %vm1185 = vcmp.eq.f32.partialorder %v1184, 8.507059e+37
        %v1186 = vand.u32 %v1030, 2147483648
        %v1187 = vor.u32 1.1754944e-38, %v1186
        %v1188 = vsel %vm1185, %v1187, %v1183
        %v1189 = vrcp.pop %v1033
        %v1190 = vmul.f32 %v1033, %v1189
        %v1191 = vsub.f32 1.0, %v1190
        %v1192 = vmul.f32 %v1189, %v1191
        %v1193 = vadd.f32 %v1189, %v1192
        %vm1194 = vweird.f32 %v1033
        %vm1195 = vweird.f32 %v1189
        %vm1196 = vmor %vm1194, %vm1195
        %v1197 = vsel %vm1196, %v1189, %v1193
        %v1198 = vand.u32 2147483647, %v1033
        %vm1199 = vcmp.eq.f32.partialorder %v1198, 8.507059e+37
        %v1200 = vand.u32 %v1033, 2147483648
        %v1201 = vor.u32 1.1754944e-38, %v1200
        %v1202 = vsel %vm1199, %v1201, %v1197
        %v1203 = vrcp.pop %v1036
        %v1204 = vmul.f32 %v1036, %v1203
        %v1205 = vsub.f32 1.0, %v1204
        %v1206 = vmul.f32 %v1203, %v1205
        %v1207 = vadd.f32 %v1203, %v1206
        %vm1208 = vweird.f32 %v1036
        %vm1209 = vweird.f32 %v1203
        %vm1210 = vmor %vm1208, %vm1209
        %v1211 = vsel %vm1210, %v1203, %v1207
        %v1212 = vand.u32 2147483647, %v1036
        %vm1213 = vcmp.eq.f32.partialorder %v1212, 8.507059e+37
        %v1214 = vand.u32 %v1036, 2147483648
        %v1215 = vor.u32 1.1754944e-38, %v1214
        %v1216 = vsel %vm1213, %v1215, %v1211
        %v1217 = vrcp.pop %v1039
        %v1218 = vmul.f32 %v1039, %v1217
        %v1219 = vsub.f32 1.0, %v1218
        %v1220 = vmul.f32 %v1217, %v1219
        %v1221 = vadd.f32 %v1217, %v1220
        %vm1222 = vweird.f32 %v1039
        %vm1223 = vweird.f32 %v1217
        %vm1224 = vmor %vm1222, %vm1223
        %v1225 = vsel %vm1224, %v1217, %v1221
        %v1226 = vand.u32 2147483647, %v1039
        %vm1227 = vcmp.eq.f32.partialorder %v1226, 8.507059e+37
        %v1228 = vand.u32 %v1039, 2147483648
        %v1229 = vor.u32 1.1754944e-38, %v1228
        %v1230 = vsel %vm1227, %v1229, %v1225
        %v1231 = vrcp.pop %v1042
        %v1232 = vmul.f32 %v1042, %v1231
        %v1233 = vsub.f32 1.0, %v1232
        %v1234 = vmul.f32 %v1231, %v1233
        %v1235 = vadd.f32 %v1231, %v1234
        %vm1236 = vweird.f32 %v1042
        %vm1237 = vweird.f32 %v1231
        %vm1238 = vmor %vm1236, %vm1237
        %v1239 = vsel %vm1238, %v1231, %v1235
        %v1240 = vand.u32 2147483647, %v1042
        %vm1241 = vcmp.eq.f32.partialorder %v1240, 8.507059e+37
        %v1242 = vand.u32 %v1042, 2147483648
        %v1243 = vor.u32 1.1754944e-38, %v1242
        %v1244 = vsel %vm1241, %v1243, %v1239
        %v1245 = vrcp.pop %v1045
        %v1246 = vmul.f32 %v1045, %v1245
        %v1247 = vsub.f32 1.0, %v1246
        %v1248 = vmul.f32 %v1245, %v1247
        %v1249 = vadd.f32 %v1245, %v1248
        %vm1250 = vweird.f32 %v1045
        %vm1251 = vweird.f32 %v1245
        %vm1252 = vmor %vm1250, %vm1251
        %v1253 = vsel %vm1252, %v1245, %v1249
        %v1254 = vand.u32 2147483647, %v1045
        %vm1255 = vcmp.eq.f32.partialorder %v1254, 8.507059e+37
        %v1256 = vand.u32 %v1045, 2147483648
        %v1257 = vor.u32 1.1754944e-38, %v1256
        %v1258 = vsel %vm1255, %v1257, %v1253
        %v1259 = vrcp.pop %v1048
        %v1260 = vmul.f32 %v1048, %v1259
        %v1261 = vsub.f32 1.0, %v1260
        %v1262 = vmul.f32 %v1259, %v1261
        %v1263 = vadd.f32 %v1259, %v1262
        %vm1264 = vweird.f32 %v1048
        %vm1265 = vweird.f32 %v1259
        %vm1266 = vmor %vm1264, %vm1265
        %v1267 = vsel %vm1266, %v1259, %v1263
        %v1268 = vand.u32 2147483647, %v1048
        %vm1269 = vcmp.eq.f32.partialorder %v1268, 8.507059e+37
        %v1270 = vand.u32 %v1048, 2147483648
        %v1271 = vor.u32 1.1754944e-38, %v1270
        %v1272 = vsel %vm1269, %v1271, %v1267
        %v1273 = vmul.f32 %v938, %v1062
        %v1274 = vmul.f32 %v940, %v1062
        %v1275 = vmul.f32 %v942, %v1076
        %v1276 = vmul.f32 %v944, %v1076
        %v1277 = vmul.f32 %v946, %v1090
        %v1278 = vmul.f32 %v948, %v1090
        %v1279 = vmul.f32 %v950, %v1104
        %v1280 = vmul.f32 %v952, %v1104
        %v1281 = vmul.f32 %v954, %v1118
        %v1282 = vmul.f32 %v956, %v1118
        %v1283 = vmul.f32 %v958, %v1132
        %v1284 = vmul.f32 %v960, %v1132
        %v1285 = vmul.f32 %v962, %v1146
        %v1286 = vmul.f32 %v964, %v1146
        %v1287 = vmul.f32 %v966, %v1160
        %v1288 = vmul.f32 %v968, %v1160
        %v1289 = vmul.f32 %v970, %v1174
        %v1290 = vmul.f32 %v972, %v1174
        %v1291 = vmul.f32 %v974, %v1188
        %v1292 = vmul.f32 %v976, %v1188
        %v1293 = vmul.f32 %v978, %v1202
        %v1294 = vmul.f32 %v980, %v1202
        %v1295 = vmul.f32 %v982, %v1216
        %v1296 = vmul.f32 %v984, %v1216
        %v1297 = vmul.f32 %v986, %v1230
        %v1298 = vmul.f32 %v988, %v1230
        %v1299 = vmul.f32 %v990, %v1244
        %v1300 = vmul.f32 %v992, %v1244
        %v1301 = vmul.f32 %v994, %v1258
        %v1302 = vmul.f32 %v996, %v1258
        %v1303 = vmul.f32 %v998, %v1272
        %v1304 = vmul.f32 %v1000, %v1272
        %1306 = vst [vmem:[#allocation1] ss:$2 sm:$0xff] %v606
        %v1307 = vld.sshfl [vmem:[#allocation1] sm:$0xff pattern:$0x75316420]
        %v1308 = vld.sshfl [vmem:[#allocation1 + $0x8] sm:$0xff pattern:$0x75316420]
        %1311 = vmatpush.xpose.msra.mxu0 %v1303
        %1312 = vmatpush.xpose.msra.mxu0 %v1301
        %1313 = vmatpush.xpose.msra.mxu0 %v1299
        %1314 = vmatpush.xpose.msra.mxu0 %v1297
        %1315 = vmatpush.xpose.msra.mxu0 %v1295
        %1316 = vmatpush.xpose.msra.mxu0 %v1293
        %1317 = vmatpush.xpose.msra.mxu0 %v1291
        %1318 = vmatpush.xpose.msra.mxu0 %v1289
        %1319 = vmatpush.xpose.msra.mxu0 %v1287
        %1320 = vmatpush.xpose.msra.mxu0 %v1285
        %1321 = vmatpush.xpose.msra.mxu0 %v1283
        %1322 = vmatpush.xpose.msra.mxu0 %v1281
        %1323 = vmatpush.xpose.msra.mxu0 %v1279
        %1324 = vmatpush.xpose.msra.mxu0 %v1277
        %1325 = vmatpush.xpose.msra.mxu0 %v1275
        %1326 = vmatpush.xpose.msra.mxu0 %v1273
        %1327 = vmatmul.f32.gmra.mxu0 %v1307
        %v1328 = vpop.f32.mrf.mxu0
        %v1329 = vadd.f32 0.0, %v1328
        %1330 = vdwg.mxu0
        %1331 = vmatpush.xpose.msra.mxu0 %v1304
        %1332 = vmatpush.xpose.msra.mxu0 %v1302
        %1333 = vmatpush.xpose.msra.mxu0 %v1300
        %1334 = vmatpush.xpose.msra.mxu0 %v1298
        %1335 = vmatpush.xpose.msra.mxu0 %v1296
        %1336 = vmatpush.xpose.msra.mxu0 %v1294
        %1337 = vmatpush.xpose.msra.mxu0 %v1292
        %1338 = vmatpush.xpose.msra.mxu0 %v1290
        %1339 = vmatpush.xpose.msra.mxu0 %v1288
        %1340 = vmatpush.xpose.msra.mxu0 %v1286
        %1341 = vmatpush.xpose.msra.mxu0 %v1284
        %1342 = vmatpush.xpose.msra.mxu0 %v1282
        %1343 = vmatpush.xpose.msra.mxu0 %v1280
        %1344 = vmatpush.xpose.msra.mxu0 %v1278
        %1345 = vmatpush.xpose.msra.mxu0 %v1276
        %1346 = vmatpush.xpose.msra.mxu0 %v1274
        %1347 = vmatmul.f32.gmra.mxu0 %v1308
        %v1348 = vpop.f32.mrf.mxu0
        %v1349 = vadd.f32 %v1329, %v1348
        %1350 = vdwg.mxu0
        %v1351 = vld [vmem:[%s5] sm:$0xf]
        %v1352 = vld [vmem:[%s9] sm:$0xf]
        %1354 = vset.pattern.permute.xlu0 0
        %1355 = vperm.xlu0 %1354, %v1352
        %v1356 = vpop.permute.xlu0 %1355
        %v1359 = vsel %vm577, %v1351, 0
        %v1362 = vsel %vm581, %v1349, 0
        %1364 = vmatpush.msra.mxu0 0.0
        %1365 = vmatpush.msra.mxu0 0.0
        %1366 = vmatpush.msra.mxu0 0.0
        %1367 = vmatpush.msra.mxu0 0.0
        %1368 = vmatpush.msra.mxu0 0.0
        %1369 = vmatpush.msra.mxu0 0.0
        %1370 = vmatpush.msra.mxu0 0.0
        %1371 = vmatpush.msra.mxu0 0.0
        %1372 = vmatpush.msra.mxu0 0.0
        %1373 = vmatpush.msra.mxu0 0.0
        %1374 = vmatpush.msra.mxu0 0.0
        %1375 = vmatpush.msra.mxu0 0.0
        %1376 = vmatpush.msra.mxu0 0.0
        %1377 = vmatpush.msra.mxu0 0.0
        %1378 = vmatpush.msra.mxu0 0.0
        %1379 = vmatpush.msra.mxu0 %v1362
        %1380 = vmatmul.f32.gmra.mxu0 %v1359
        %v1381 = vpop.f32.mrf.mxu0
        %v1382 = vadd.f32 %v1356, %v1381
        %1383 = vdwg.mxu0
        %v1384 = vadd.f32 %v1382, %v569
        %1385 = vst [vmem:[%s434] sm:$0xf] %v1384
        %s1386 = sand.u32 %s274, 1
        %s1387 = scalar_lea.sflag [#allocation6], %s1386
        %s1388 = sand.u32 %s274, 1
        %s1389 = smul.addr %s1388, 4
        %s1390 = scalar_lea.vmem [#allocation9], %s1389
        // Predicated region
        $region73: #{tpu_custom_call.1} parent=59 // pred_check
          %p1391 = pneg %p284
        $region74: #{tpu_custom_call.1} parent=59 // pred_check_branch
          %1393 = sbr.rel (%p1391) target = $region76
        $region75: #{tpu_custom_call.1} parent=59 // pred_region
          %1395 = vsyncadd %s1387, 0
          %s1396 = smul.addr %s34, 2
          %s1397 = sadd.s32 %s35, %s1396
          %s1398 = smul.addr %s1397, 4
          %s1399 = scalar_lea.hbm %s10, %s1398
          %s1401 = sshll.u32 %s1390, 4
          %s1402 = int_to_ptr.vmem [resolvable:$true] %s1401
          %s1403 = sshll.u32 %s1399, 4
          %s1404 = int_to_ptr.hbm [resolvable:$true] %s1403
          %1406 = dma.vmem_to_hbm [thread:$0]  %s1402, 64, %s1404, %s1387
        $region76: #{tpu_custom_call.1} parent=59 // pred_fallthru
          _
      $region60: #{tpu_custom_call.1} parent=5 // pred_fallthru
        _
      %p1407 = scmp.le.s32.totalorder 2, %s25
      // Predicated region
      $region77: #{tpu_custom_call.1} parent=5 // pred_check
        %p1408 = pneg %p1407
      $region78: #{tpu_custom_call.1} parent=5 // pred_check_branch
        %1410 = sbr.rel (%p1408) target = $region80
      $region79: #{tpu_custom_call.1} parent=5 // pred_region
        %s1411 = ssub.s32 %s25, 2
        // Predicated region
        $region81: #{tpu_custom_call.1} parent=79 // pred_check
          %p1412 = pneg %p290
        $region82: #{tpu_custom_call.1} parent=79 // pred_check_branch
          %1414 = sbr.rel (%p1412) target = $region84
        $region83: #{tpu_custom_call.1} parent=79 // pred_region
          %s1415 = sand.u32 %s275, 1
          %s1416 = scalar_lea.sflag [#allocation6], %s1415
          %s1417 = sand.u32 %s275, 1
          %s1418 = smul.addr %s1417, 4
          %s1419 = scalar_lea.vmem [#allocation9], %s1418
          %1421 = dma.done %s1416, 64
        $region84: #{tpu_custom_call.1} parent=79 // pred_fallthru
          _
      $region80: #{tpu_custom_call.1} parent=5 // pred_fallthru
        _
    $region6: #{tpu_custom_call.1} parent=1 // loop_footer
      %s29 = sadd.s32 1, %s25
    $region7: #{tpu_custom_call.1} parent=1 // loop_footer_branch
      %24 = sbr.rel target = $region3
    $region8: #{tpu_custom_call.1} parent=1 // loop_exit
      _
    %1422 = vsyncpa [#allocation5], 1
    %s1423 = scalar_lea.sflag [#allocation5], 1
    %1424 = vsyncpa %s1423, 1
    %1425 = vsyncpa [#allocation8], 1
    %s1426 = scalar_lea.sflag [#allocation8], 1
    %1427 = vsyncpa %s1426, 1
    %1428 = vsyncpa [#allocation6], 1
    %s1429 = scalar_lea.sflag [#allocation6], 1
    %1430 = vsyncpa %s1429, 1

</llo_original>
